<compile_context>
chip_gen: v5e
topology: v5e:2x2
jax: 0.10.0
libtpu: 0.0.40
codegen_flags: <defaults>
</compile_context>

<pallas_src>
import functools

import jax
import jax.numpy as jnp
from jax import lax
from jax.experimental import pallas as pl
from jax.experimental.pallas import tpu as pltpu


# ---------------------------------------------------------------------------
# Kernel
# ---------------------------------------------------------------------------
def _layer_norm(x, g, b, eps=1e-5):
    mu = jnp.mean(x, axis=-1, keepdims=True)
    var = jnp.mean((x - mu) ** 2, axis=-1, keepdims=True)
    return (x - mu) * lax.rsqrt(var + eps) * g + b


def fused_transformer_kernel(H,
                             e_ref, pe_ref, pad_ref, diag_ref, vec_ref,
                             wqkv_ref, wo_ref, w1_ref, w2_ref,
                             hln_ref, ow_ref, ob_ref,
                             out_ref,
                             e_scr):
    d = pl.program_id(1)
    n_layers = pl.num_programs(1)

    Bb, L, E = e_scr.shape
    dh = E // H
    scale = 1.0 / (dh ** 0.5)
    neg = jnp.float32(-1e9)

    # Load the embedded tokens once per batch block (layer axis is sequential).
    @pl.when(d == 0)
    def _():
        e_scr[...] = e_ref[...].astype(jnp.float32)

    # --- packed per-layer small tensors (one DMA instead of 8) --------------
    # rows: [g1, b1, g2, b2, bo, c2, bqkv(3E), c1(4E)]
    vec = vec_ref[0]                                          # (8, 4E) f32
    g1, b1 = vec[0, :E], vec[1, :E]
    g2, b2 = vec[2, :E], vec[3, :E]
    bo, c2 = vec[4, :E], vec[5, :E]
    bqkv = vec[6, :3 * E]
    c1 = vec[7, :]

    # --- additive attention mask, no iota / where, single add to 4-D scores -
    # maximum(..., -1e9) clamps the -2e9/-3e9 overlaps so masked entries are
    # exactly -1e9 (bit-identical to the reference where-mask behaviour,
    # including padded query rows).
    pad = pad_ref[...]                                        # (Bb, L) f32 {0,1}
    pad_neg = pad * neg
    amask = jnp.maximum(pad_neg[:, :, None] + pad_neg[:, None, :]
                        + diag_ref[...][None], neg)           # (Bb, L, L)

    # --- transformer block ---------------------------------------------------
    x = e_scr[...] + pe_ref[...].astype(jnp.float32)          # e += pos_enc
    e0 = _layer_norm(x, g1, b1)                               # (Bb, L, E) f32

    # Fused QKV projection: one full-width MXU matmul (bf16 in, f32 acc).
    e0_2d = e0.reshape(Bb * L, E)
    qkv = jnp.dot(e0_2d.astype(jnp.bfloat16), wqkv_ref[0],
                  preferred_element_type=jnp.float32) + bqkv  # (Bb*L, 3E)

    # Batched per-head attention (no per-head slicing loop / lane concat):
    # split heads once via reshape+transpose, then two batched einsums.
    def split_heads(t2d):
        t = t2d.reshape(Bb, L, H, dh)
        t = jnp.transpose(t, (0, 2, 1, 3))                    # (Bb, H, L, dh)
        return t.reshape(Bb * H, L, dh)

    qh = split_heads(qkv[:, 0 * E:1 * E])
    kh = split_heads(qkv[:, 1 * E:2 * E])
    vh = split_heads(qkv[:, 2 * E:3 * E]).astype(jnp.bfloat16)

    s = jnp.einsum('bqd,bkd->bqk', qh.astype(jnp.bfloat16), kh.astype(jnp.bfloat16),
                   preferred_element_type=jnp.float32) * scale  # (Bb*H, L, L)
    s = s.reshape(Bb, H, L, L) + amask[:, None]               # mask added once
    s = s - jnp.max(s, axis=-1, keepdims=True)
    p = jnp.exp(s)
    # approx reciprocal runs on the EUP slot; rows sum to ~1 (acceptable dev).
    p = p * pl.reciprocal(jnp.sum(p, axis=-1, keepdims=True), approx=True)
    p = p.reshape(Bb * H, L, L).astype(jnp.bfloat16)

    o = jnp.einsum('bqk,bkd->bqd', p, vh,
                   preferred_element_type=jnp.float32)        # (Bb*H, L, dh)
    attn = jnp.transpose(o.reshape(Bb, H, L, dh),
                         (0, 2, 1, 3)).reshape(Bb * L, E)     # (Bb*L, E) f32

    # Fused output projection.
    e1 = (jnp.dot(attn.astype(jnp.bfloat16), wo_ref[0],
                  preferred_element_type=jnp.float32) + bo).reshape(Bb, L, E)

    e2 = _layer_norm(e1 + e0, g2, b2)                         # residual + norm2

    # FFN (Linear 4E -> ReLU -> Linear E); bias+ReLU+bf16 cast fused so the
    # f32 (Bb*L, 4E) intermediate is not kept live into the second matmul.
    # TODO(synk): for very large E on v7x, chunk w1/w2 along the 4E hidden dim
    # (extra grid axis or emit_pipeline) to keep the streamed weights in VMEM.
    e2_2d = e2.reshape(Bb * L, E)
    h1 = jnp.dot(e2_2d.astype(jnp.bfloat16), w1_ref[0],
                 preferred_element_type=jnp.float32)
    h1 = jnp.maximum(h1 + c1, 0.0).astype(jnp.bfloat16)
    e3 = (jnp.dot(h1, w2_ref[0], preferred_element_type=jnp.float32) + c2
          ).reshape(Bb, L, E)
    e3 = jnp.where(pad[:, :, None] > 0.5, 0.0, e3)            # masked_fill_(pad, 0)

    e_scr[...] = e3 + e2                                      # residual (mlp)

    # --- fused head: final LayerNorm + mean-pool + out Linear ----------------
    @pl.when(d == n_layers - 1)
    def _():
        hln = hln_ref[...]                                    # (2, E)
        xn = _layer_norm(e_scr[...], hln[0], hln[1])
        m = jnp.sum(xn, axis=1) * (1.0 / L)                   # mean over dim=1
        out_ref[...] = (jnp.dot(m.astype(jnp.bfloat16), ow_ref[...],
                                preferred_element_type=jnp.float32) + ob_ref[...])


# ---------------------------------------------------------------------------
# Wrapper
# ---------------------------------------------------------------------------
def _vmem_limit_bytes():
    # ~7/8 of physical VMEM (-> ~56 MiB on v7x), capped at 100 MiB on
    # 128-MiB parts; fall back to 64 MiB if the query is unavailable.
    try:
        cap = pltpu.get_tpu_info().vmem_capacity_bytes
        return min(int(cap) * 7 // 8, 100 * 1024 * 1024)
    except Exception:
        return 64 * 1024 * 1024


def _pick_batch_block(B, L):
    # Fill the MXU (Bb*L >= 256) and, when B allows, leave >= 2 programs on
    # the "parallel" batch axis so v7x's second TensorCore gets work.
    # Bb must be B itself or a multiple of 8 (sublane-aligned block dim).
    for bb in range(B - 1, 0, -1):
        if B % bb == 0 and bb % 8 == 0 and bb * L >= 256 and B // bb >= 2:
            return bb
    return B


def graph_pe_transformer(tokens, padding, adj, params, H, D):
    B, L = tokens.shape
    E = params["embed"].shape[1]
    F = params["out_w"].shape[1]

    # Embedding lookup (gather glue, plain JAX); shipped as bf16 payload.
    e = params["embed"][tokens].astype(jnp.bfloat16)                  # (B, L, E)

    # TODO(synk): positional_encodings module is unspecified upstream; use a
    # simple degree-based linear positional encoding of the adjacency matrix.
    deg = jnp.sum(adj, axis=-1, keepdims=True).astype(jnp.float32)    # (B, L, 1)
    pos_enc = (deg * params["pe_w"] + params["pe_b"]).astype(jnp.bfloat16)

    pad_f = padding.astype(jnp.float32)                               # (B, L)
    diag_neg = jnp.eye(L, dtype=jnp.float32) * jnp.float32(-1e9)      # (L, L)

    Bb = _pick_batch_block(B, L)
    nb = B // Bb

    def bmap3(b, d): return (b, 0, 0)      # per-batch 3D activation blocks
    def bmap2(b, d): return (b, 0)         # per-batch 2D blocks
    def lmap3(b, d): return (d, 0, 0)      # per-layer stacked weights
    def cmap2(b, d): return (0, 0)         # layer/batch-invariant constants

    in_specs = [
        pl.BlockSpec((Bb, L, E), bmap3),          # e (bf16)
        pl.BlockSpec((Bb, L, E), bmap3),          # pos_enc (bf16)
        pl.BlockSpec((Bb, L), bmap2),             # padding vector (f32)
        pl.BlockSpec((L, L), cmap2),              # diagonal additive mask
        pl.BlockSpec((1, 8, 4 * E), lmap3),       # packed per-layer vectors
        pl.BlockSpec((1, E, 3 * E), lmap3),       # wqkv (fused)
        pl.BlockSpec((1, E, E), lmap3),           # wo
        pl.BlockSpec((1, E, 4 * E), lmap3),       # w1
        pl.BlockSpec((1, 4 * E, E), lmap3),       # w2
        pl.BlockSpec((2, E), cmap2),              # head layernorm (gain; bias)
        pl.BlockSpec((E, F), cmap2),              # out_map weight
        pl.BlockSpec((1, F), cmap2),              # out_map bias
    ]

    args = (e, pos_enc, pad_f, diag_neg,
            params["layer_vec"],
            params["wqkv"], params["wo"], params["w1"], params["w2"],
            params["head_ln"], params["out_w"], params["out_b"])

    return pl.pallas_call(
        functools.partial(fused_transformer_kernel, H),
        out_shape=jax.ShapeDtypeStruct((B, F), jnp.float32),
        grid_spec=pltpu.PrefetchScalarGridSpec(
            num_scalar_prefetch=0,
            grid=(nb, D),
            in_specs=in_specs,
            out_specs=pl.BlockSpec((Bb, F), bmap2),
            scratch_shapes=[pltpu.VMEM((Bb, L, E), jnp.float32)]),
        compiler_params=pltpu.CompilerParams(
            dimension_semantics=("parallel", "arbitrary"),
            vmem_limit_bytes=_vmem_limit_bytes()),
    )(*args)


# ---------------------------------------------------------------------------
# Deterministic parameter initialization (synthetic weights)
# ---------------------------------------------------------------------------
def init_params(key, n_tokens, out_features, E, H, D):
    assert E % H == 0
    keys = jax.random.split(key, 8)

    def nrm(k, shape, scale, dtype=jnp.float32):
        return (scale * jax.random.normal(k, shape)).astype(dtype)

    p = {}
    emb = nrm(keys[0], (n_tokens, E), 1.0)
    p["embed"] = emb.at[0].set(0.0)                    # padding_idx=0
    p["pe_w"] = nrm(keys[1], (1, 1, E), 0.1)
    p["pe_b"] = nrm(keys[2], (1, 1, E), 0.1)

    # Per-layer matmul weights stacked along a leading D axis, stored bf16.
    # TODO(synk): int8 (v6e) / fp8 (v7x) weight streaming left as future work.
    p["wqkv"] = nrm(keys[3], (D, E, 3 * E), E ** -0.5, jnp.bfloat16)
    p["wo"] = nrm(keys[4], (D, E, E), E ** -0.5, jnp.bfloat16)
    p["w1"] = nrm(keys[5], (D, E, 4 * E), E ** -0.5, jnp.bfloat16)
    p["w2"] = nrm(keys[6], (D, 4 * E, E), (4 * E) ** -0.5, jnp.bfloat16)

    # All tiny per-layer tensors packed into one (D, 8, 4E) array:
    # rows = [g1, b1, g2, b2, bo, c2, bqkv(3E), c1(4E)]; biases zero-init.
    vec = jnp.zeros((D, 8, 4 * E), jnp.float32)
    vec = vec.at[:, 0, :E].set(1.0)                    # g1 = 1
    vec = vec.at[:, 2, :E].set(1.0)                    # g2 = 1
    p["layer_vec"] = vec

    p["head_ln"] = jnp.stack([jnp.ones((E,), jnp.float32),
                              jnp.zeros((E,), jnp.float32)], axis=0)   # (2, E)
    p["out_w"] = nrm(keys[7], (E, out_features), E ** -0.5, jnp.bfloat16)
    p["out_b"] = jnp.zeros((1, out_features), jnp.float32)
    return p


# ---------------------------------------------------------------------------
# Example run
# ---------------------------------------------------------------------------
if __name__ == "__main__":
    B, L, E, H, D = 2, 8, 32, 4, 2
    n_tokens, out_features = 16, 8

    key = jax.random.PRNGKey(0)
    k_tok, k_adj, k_par = jax.random.split(key, 3)

    lengths = jnp.array([6, 5])
    positions = jnp.arange(L)
    padding = positions[None, :] >= lengths[:, None]                  # (B, L) bool

    tokens = jax.random.randint(k_tok, (B, L), 1, n_tokens)
    tokens = jnp.where(padding, 0, tokens)                            # (B, L) int32

    adj = (jax.random.uniform(k_adj, (B, L, L)) > 0.5).astype(jnp.float32)
    adj = ((adj + jnp.transpose(adj, (0, 2, 1))) > 0).astype(jnp.float32)
    adj = adj * (~padding)[:, :, None] * (~padding)[:, None, :]       # (B, L, L)

    params = init_params(k_par, n_tokens, out_features, E, H, D)

    out = graph_pe_transformer(tokens, padding, adj, params, H=H, D=D)
    out = jax.block_until_ready(out)

    assert out.shape == (B, out_features), out.shape
    assert bool(jnp.all(jnp.isfinite(out)))
    print("KERNEL_OK")
</pallas_src>

<mosaic_0001>
module attributes {stable_mosaic.version = 11 : i64} {
  func.func @fused_transformer_kernel(%arg0: i32, %arg1: i32, %arg2: memref<2x8x32xbf16, #tpu.memory_space<vmem>>, %arg3: memref<2x8x32xbf16, #tpu.memory_space<vmem>>, %arg4: memref<2x8xf32, #tpu.memory_space<vmem>>, %arg5: memref<8x8xf32, #tpu.memory_space<vmem>>, %arg6: memref<1x8x128xf32, #tpu.memory_space<vmem>>, %arg7: memref<1x32x96xbf16, #tpu.memory_space<vmem>>, %arg8: memref<1x32x32xbf16, #tpu.memory_space<vmem>>, %arg9: memref<1x32x128xbf16, #tpu.memory_space<vmem>>, %arg10: memref<1x128x32xbf16, #tpu.memory_space<vmem>>, %arg11: memref<2x32xf32, #tpu.memory_space<vmem>>, %arg12: memref<32x8xbf16, #tpu.memory_space<vmem>>, %arg13: memref<1x8xf32, #tpu.memory_space<vmem>>, %arg14: memref<2x8xf32, #tpu.memory_space<vmem>>, %arg15: memref<2x8x32xf32, #tpu.memory_space<vmem>>) attributes {dimension_semantics = [#tpu.dimension_semantics<parallel>, #tpu.dimension_semantics<arbitrary>], iteration_bounds = array<i64: 1, 2>, scalar_prefetch = 0 : i64, scratch_operands = 1 : i64, tpu.core_type = #tpu.core_type<tc>, window_params = [{transform_indices = @transform_0, window_bounds = array<i64: 2, 8, 32>}, {transform_indices = @transform_1, window_bounds = array<i64: 2, 8, 32>}, {transform_indices = @transform_2, window_bounds = array<i64: 2, 8>}, {pipeline_mode = #tpu.pipeline_mode<synchronous>, transform_indices = @transform_3, window_bounds = array<i64: 8, 8>}, {transform_indices = @transform_4, window_bounds = array<i64: 1, 8, 128>}, {transform_indices = @transform_5, window_bounds = array<i64: 1, 32, 96>}, {transform_indices = @transform_6, window_bounds = array<i64: 1, 32, 32>}, {transform_indices = @transform_7, window_bounds = array<i64: 1, 32, 128>}, {transform_indices = @transform_8, window_bounds = array<i64: 1, 128, 32>}, {pipeline_mode = #tpu.pipeline_mode<synchronous>, transform_indices = @transform_9, window_bounds = array<i64: 2, 32>}, {pipeline_mode = #tpu.pipeline_mode<synchronous>, transform_indices = @transform_10, window_bounds = array<i64: 32, 8>}, {pipeline_mode = #tpu.pipeline_mode<synchronous>, transform_indices = @transform_11, window_bounds = array<i64: 1, 8>}, {transform_indices = @transform_12, window_bounds = array<i64: 2, 8>}]} {
    %c0_i32 = arith.constant 0 : i32
    %0 = arith.cmpi eq, %arg1, %c0_i32 : i32
    %1 = arith.extui %0 : i1 to i32
    %c0_i32_0 = arith.constant 0 : i32
    %2 = arith.cmpi ne, %1, %c0_i32_0 : i32
    scf.if %2 {
      %c0_52 = arith.constant 0 : index
      %c0_53 = arith.constant 0 : index
      %c0_54 = arith.constant 0 : index
      %172 = vector.load %arg2[%c0_52, %c0_53, %c0_54] : memref<2x8x32xbf16, #tpu.memory_space<vmem>>, vector<2x8x32xbf16>
      %173 = arith.extf %172 : vector<2x8x32xbf16> to vector<2x8x32xf32>
      %c0_55 = arith.constant 0 : index
      %c0_56 = arith.constant 0 : index
      %c0_57 = arith.constant 0 : index
      %174 = vector.load %arg15[%c0_55, %c0_56, %c0_57] : memref<2x8x32xf32, #tpu.memory_space<vmem>>, vector<2x8x32xf32>
      tpu.vector_store %arg15[%c0_55, %c0_56, %c0_57], %173 {strides = array<i32>} : memref<2x8x32xf32, #tpu.memory_space<vmem>>, vector<2x8x32xf32>,
    } else {
    }
    %c0 = arith.constant 0 : index
    %c0_1 = arith.constant 0 : index
    %c0_2 = arith.constant 0 : index
    %3 = vector.load %arg6[%c0, %c0_1, %c0_2] : memref<1x8x128xf32, #tpu.memory_space<vmem>>, vector<1x8x128xf32>
    %4 = vector.shape_cast %3 : vector<1x8x128xf32> to vector<8x128xf32>
    %5 = vector.extract_strided_slice %4 {offsets = [0, 0], sizes = [1, 32], strides = [1, 1]} : vector<8x128xf32> to vector<1x32xf32>
    %6 = vector.shape_cast %5 : vector<1x32xf32> to vector<32xf32>
    %7 = vector.extract_strided_slice %4 {offsets = [1, 0], sizes = [1, 32], strides = [1, 1]} : vector<8x128xf32> to vector<1x32xf32>
    %8 = vector.shape_cast %7 : vector<1x32xf32> to vector<32xf32>
    %9 = vector.extract_strided_slice %4 {offsets = [2, 0], sizes = [1, 32], strides = [1, 1]} : vector<8x128xf32> to vector<1x32xf32>
    %10 = vector.shape_cast %9 : vector<1x32xf32> to vector<32xf32>
    %11 = vector.extract_strided_slice %4 {offsets = [3, 0], sizes = [1, 32], strides = [1, 1]} : vector<8x128xf32> to vector<1x32xf32>
    %12 = vector.shape_cast %11 : vector<1x32xf32> to vector<32xf32>
    %13 = vector.extract_strided_slice %4 {offsets = [4, 0], sizes = [1, 32], strides = [1, 1]} : vector<8x128xf32> to vector<1x32xf32>
    %14 = vector.shape_cast %13 : vector<1x32xf32> to vector<32xf32>
    %15 = vector.extract_strided_slice %4 {offsets = [5, 0], sizes = [1, 32], strides = [1, 1]} : vector<8x128xf32> to vector<1x32xf32>
    %16 = vector.shape_cast %15 : vector<1x32xf32> to vector<32xf32>
    %17 = vector.extract_strided_slice %4 {offsets = [6, 0], sizes = [1, 96], strides = [1, 1]} : vector<8x128xf32> to vector<1x96xf32>
    %18 = vector.shape_cast %17 : vector<1x96xf32> to vector<96xf32>
    %19 = vector.extract_strided_slice %4 {offsets = [7, 0], sizes = [1, 128], strides = [1, 1]} : vector<8x128xf32> to vector<1x128xf32>
    %20 = vector.shape_cast %19 : vector<1x128xf32> to vector<128xf32>
    %c0_3 = arith.constant 0 : index
    %c0_4 = arith.constant 0 : index
    %21 = vector.load %arg4[%c0_3, %c0_4] : memref<2x8xf32, #tpu.memory_space<vmem>>, vector<2x8xf32>
    %cst = arith.constant -1.000000e+09 : f32
    %22 = vector.broadcast %cst : f32 to vector<2x8xf32>
    %23 = arith.mulf %21, %22 : vector<2x8xf32>
    %24 = vector.shape_cast %23 : vector<2x8xf32> to vector<2x8x1xf32>
    %25 = vector.shape_cast %23 : vector<2x8xf32> to vector<2x1x8xf32>
    %26 = vector.broadcast %24 : vector<2x8x1xf32> to vector<2x8x8xf32>
    %27 = vector.broadcast %25 : vector<2x1x8xf32> to vector<2x8x8xf32>
    %28 = arith.addf %26, %27 : vector<2x8x8xf32>
    %c0_5 = arith.constant 0 : index
    %c0_6 = arith.constant 0 : index
    %29 = vector.load %arg5[%c0_5, %c0_6] : memref<8x8xf32, #tpu.memory_space<vmem>>, vector<8x8xf32>
    %30 = vector.shape_cast %29 : vector<8x8xf32> to vector<1x8x8xf32>
    %31 = vector.broadcast %30 : vector<1x8x8xf32> to vector<2x8x8xf32>
    %32 = arith.addf %28, %31 : vector<2x8x8xf32>
    %cst_7 = arith.constant -1.000000e+09 : f32
    %33 = vector.broadcast %cst_7 : f32 to vector<2x8x8xf32>
    %34 = arith.maximumf %32, %33 : vector<2x8x8xf32>
    %c0_8 = arith.constant 0 : index
    %c0_9 = arith.constant 0 : index
    %c0_10 = arith.constant 0 : index
    %35 = vector.load %arg15[%c0_8, %c0_9, %c0_10] : memref<2x8x32xf32, #tpu.memory_space<vmem>>, vector<2x8x32xf32>
    %c0_11 = arith.constant 0 : index
    %c0_12 = arith.constant 0 : index
    %c0_13 = arith.constant 0 : index
    %36 = vector.load %arg3[%c0_11, %c0_12, %c0_13] : memref<2x8x32xbf16, #tpu.memory_space<vmem>>, vector<2x8x32xbf16>
    %37 = arith.extf %36 : vector<2x8x32xbf16> to vector<2x8x32xf32>
    %38 = arith.addf %35, %37 : vector<2x8x32xf32>
    %cst_14 = arith.constant dense<0.000000e+00> : vector<2x8xf32>
    %39 = vector.multi_reduction <add>, %38, %cst_14 [2] : vector<2x8x32xf32> to vector<2x8xf32>
    %40 = vector.shape_cast %39 : vector<2x8xf32> to vector<2x8x1xf32>
    %cst_15 = arith.constant 3.200000e+01 : f32
    %41 = vector.broadcast %cst_15 : f32 to vector<2x8x1xf32>
    %42 = arith.divf %40, %41 : vector<2x8x1xf32>
    %43 = vector.broadcast %42 : vector<2x8x1xf32> to vector<2x8x32xf32>
    %44 = arith.subf %38, %43 : vector<2x8x32xf32>
    %45 = arith.mulf %44, %44 : vector<2x8x32xf32>
    %cst_16 = arith.constant dense<0.000000e+00> : vector<2x8xf32>
    %46 = vector.multi_reduction <add>, %45, %cst_16 [2] : vector<2x8x32xf32> to vector<2x8xf32>
    %47 = vector.shape_cast %46 : vector<2x8xf32> to vector<2x8x1xf32>
    %cst_17 = arith.constant 3.200000e+01 : f32
    %48 = vector.broadcast %cst_17 : f32 to vector<2x8x1xf32>
    %49 = arith.divf %47, %48 : vector<2x8x1xf32>
    %50 = vector.broadcast %42 : vector<2x8x1xf32> to vector<2x8x32xf32>
    %51 = arith.subf %38, %50 : vector<2x8x32xf32>
    %cst_18 = arith.constant 9.99999974E-6 : f32
    %52 = vector.broadcast %cst_18 : f32 to vector<2x8x1xf32>
    %53 = arith.addf %49, %52 : vector<2x8x1xf32>
    %54 = math.rsqrt %53 : vector<2x8x1xf32>
    %55 = vector.broadcast %54 : vector<2x8x1xf32> to vector<2x8x32xf32>
    %56 = arith.mulf %51, %55 : vector<2x8x32xf32>
    %57 = vector.shape_cast %6 : vector<32xf32> to vector<1x1x32xf32>
    %58 = vector.broadcast %57 : vector<1x1x32xf32> to vector<2x8x32xf32>
    %59 = arith.mulf %56, %58 : vector<2x8x32xf32>
    %60 = vector.shape_cast %8 : vector<32xf32> to vector<1x1x32xf32>
    %61 = vector.broadcast %60 : vector<1x1x32xf32> to vector<2x8x32xf32>
    %62 = arith.addf %59, %61 : vector<2x8x32xf32>
    %63 = vector.shape_cast %62 : vector<2x8x32xf32> to vector<16x32xf32>
    %64 = arith.truncf %63 : vector<16x32xf32> to vector<16x32xbf16>
    %c0_19 = arith.constant 0 : index
    %c0_20 = arith.constant 0 : index
    %c0_21 = arith.constant 0 : index
    %65 = vector.load %arg7[%c0_19, %c0_20, %c0_21] : memref<1x32x96xbf16, #tpu.memory_space<vmem>>, vector<1x32x96xbf16>
    %66 = vector.shape_cast %65 : vector<1x32x96xbf16> to vector<32x96xbf16>
    %cst_22 = arith.constant dense<0.000000e+00> : vector<16x96xf32>
    %67 = tpu.matmul %64, %66, %cst_22 {dimension_numbers = #tpu.dot_dimension_numbers<[1], [0], [0], [1], [0, 0, 1, 1], [], []>} : vector<16x32xbf16>, vector<32x96xbf16>, vector<16x96xf32> -> vector<16x96xf32>
    %68 = vector.shape_cast %18 : vector<96xf32> to vector<1x96xf32>
    %69 = vector.broadcast %68 : vector<1x96xf32> to vector<16x96xf32>
    %70 = arith.addf %67, %69 : vector<16x96xf32>
    %71 = vector.extract_strided_slice %70 {offsets = [0, 0], sizes = [16, 32], strides = [1, 1]} : vector<16x96xf32> to vector<16x32xf32>
    %72 = vector.shape_cast %71 : vector<16x32xf32> to vector<2x8x4x8xf32>
    %73 = tpu.transpose %72, [0, 2, 1, 3] : vector<2x8x4x8xf32> -> vector<2x4x8x8xf32>
    %74 = vector.shape_cast %73 : vector<2x4x8x8xf32> to vector<8x8x8xf32>
    %75 = vector.extract_strided_slice %70 {offsets = [0, 32], sizes = [16, 32], strides = [1, 1]} : vector<16x96xf32> to vector<16x32xf32>
    %76 = vector.shape_cast %75 : vector<16x32xf32> to vector<2x8x4x8xf32>
    %77 = tpu.transpose %76, [0, 2, 1, 3] : vector<2x8x4x8xf32> -> vector<2x4x8x8xf32>
    %78 = vector.shape_cast %77 : vector<2x4x8x8xf32> to vector<8x8x8xf32>
    %79 = vector.extract_strided_slice %70 {offsets = [0, 64], sizes = [16, 32], strides = [1, 1]} : vector<16x96xf32> to vector<16x32xf32>
    %80 = vector.shape_cast %79 : vector<16x32xf32> to vector<2x8x4x8xf32>
    %81 = tpu.transpose %80, [0, 2, 1, 3] : vector<2x8x4x8xf32> -> vector<2x4x8x8xf32>
    %82 = vector.shape_cast %81 : vector<2x4x8x8xf32> to vector<8x8x8xf32>
    %83 = arith.truncf %82 : vector<8x8x8xf32> to vector<8x8x8xbf16>
    %84 = arith.truncf %74 : vector<8x8x8xf32> to vector<8x8x8xbf16>
    %85 = arith.truncf %78 : vector<8x8x8xf32> to vector<8x8x8xbf16>
    "tpu.trace_start"() <{level = 10 : i32, message = "bqd,bkd->bqk"}> : () -> ()
    %cst_23 = arith.constant dense<0.000000e+00> : vector<8x8x8xf32>
    %86 = tpu.matmul %84, %85, %cst_23 {dimension_numbers = #tpu.dot_dimension_numbers<[2], [2], [1], [1], [0, 0, 0, 1, 1, 1], [0], [0]>} : vector<8x8x8xbf16>, vector<8x8x8xbf16>, vector<8x8x8xf32> -> vector<8x8x8xf32>
    "tpu.trace_stop"() : () -> ()
    %cst_24 = arith.constant 0.353553385 : f32
    %87 = vector.broadcast %cst_24 : f32 to vector<8x8x8xf32>
    %88 = arith.mulf %86, %87 : vector<8x8x8xf32>
    %89 = vector.shape_cast %88 : vector<8x8x8xf32> to vector<2x4x8x8xf32>
    %90 = vector.shape_cast %34 : vector<2x8x8xf32> to vector<2x1x8x8xf32>
    %91 = vector.broadcast %90 : vector<2x1x8x8xf32> to vector<2x4x8x8xf32>
    %92 = arith.addf %89, %91 : vector<2x4x8x8xf32>
    %cst_25 = arith.constant dense<0xFF800000> : vector<2x4x8xf32>
    %93 = vector.multi_reduction <maximumf>, %92, %cst_25 [3] : vector<2x4x8x8xf32> to vector<2x4x8xf32>
    %94 = vector.shape_cast %93 : vector<2x4x8xf32> to vector<2x4x8x1xf32>
    %95 = vector.broadcast %94 : vector<2x4x8x1xf32> to vector<2x4x8x8xf32>
    %96 = arith.subf %92, %95 : vector<2x4x8x8xf32>
    %97 = math.exp %96 : vector<2x4x8x8xf32>
    %cst_26 = arith.constant dense<0.000000e+00> : vector<2x4x8xf32>
    %98 = vector.multi_reduction <add>, %97, %cst_26 [3] : vector<2x4x8x8xf32> to vector<2x4x8xf32>
    %99 = vector.shape_cast %98 : vector<2x4x8xf32> to vector<2x4x8x1xf32>
    %100 = tpu.reciprocal %99 {approx = true} : vector<2x4x8x1xf32> -> vector<2x4x8x1xf32>
    %101 = vector.broadcast %100 : vector<2x4x8x1xf32> to vector<2x4x8x8xf32>
    %102 = arith.mulf %97, %101 : vector<2x4x8x8xf32>
    %103 = vector.shape_cast %102 : vector<2x4x8x8xf32> to vector<8x8x8xf32>
    %104 = arith.truncf %103 : vector<8x8x8xf32> to vector<8x8x8xbf16>
    "tpu.trace_start"() <{level = 10 : i32, message = "bqk,bkd->bqd"}> : () -> ()
    %cst_27 = arith.constant dense<0.000000e+00> : vector<8x8x8xf32>
    %105 = tpu.matmul %104, %83, %cst_27 {dimension_numbers = #tpu.dot_dimension_numbers<[2], [1], [1], [2], [0, 0, 0, 1, 1, 2], [0], [0]>} : vector<8x8x8xbf16>, vector<8x8x8xbf16>, vector<8x8x8xf32> -> vector<8x8x8xf32>
    "tpu.trace_stop"() : () -> ()
    %106 = vector.shape_cast %105 : vector<8x8x8xf32> to vector<2x4x8x8xf32>
    %107 = tpu.transpose %106, [0, 2, 1, 3] : vector<2x4x8x8xf32> -> vector<2x8x4x8xf32>
    %108 = vector.shape_cast %107 : vector<2x8x4x8xf32> to vector<16x32xf32>
    %109 = arith.truncf %108 : vector<16x32xf32> to vector<16x32xbf16>
    %c0_28 = arith.constant 0 : index
    %c0_29 = arith.constant 0 : index
    %c0_30 = arith.constant 0 : index
    %110 = vector.load %arg8[%c0_28, %c0_29, %c0_30] : memref<1x32x32xbf16, #tpu.memory_space<vmem>>, vector<1x32x32xbf16>
    %111 = vector.shape_cast %110 : vector<1x32x32xbf16> to vector<32x32xbf16>
    %cst_31 = arith.constant dense<0.000000e+00> : vector<16x32xf32>
    %112 = tpu.matmul %109, %111, %cst_31 {dimension_numbers = #tpu.dot_dimension_numbers<[1], [0], [0], [1], [0, 0, 1, 1], [], []>} : vector<16x32xbf16>, vector<32x32xbf16>, vector<16x32xf32> -> vector<16x32xf32>
    %113 = vector.shape_cast %14 : vector<32xf32> to vector<1x32xf32>
    %114 = vector.broadcast %113 : vector<1x32xf32> to vector<16x32xf32>
    %115 = arith.addf %112, %114 : vector<16x32xf32>
    %116 = vector.shape_cast %115 : vector<16x32xf32> to vector<2x8x32xf32>
    %117 = arith.addf %116, %62 : vector<2x8x32xf32>
    %cst_32 = arith.constant dense<0.000000e+00> : vector<2x8xf32>
    %118 = vector.multi_reduction <add>, %117, %cst_32 [2] : vector<2x8x32xf32> to vector<2x8xf32>
    %119 = vector.shape_cast %118 : vector<2x8xf32> to vector<2x8x1xf32>
    %cst_33 = arith.constant 3.200000e+01 : f32
    %120 = vector.broadcast %cst_33 : f32 to vector<2x8x1xf32>
    %121 = arith.divf %119, %120 : vector<2x8x1xf32>
    %122 = vector.broadcast %121 : vector<2x8x1xf32> to vector<2x8x32xf32>
    %123 = arith.subf %117, %122 : vector<2x8x32xf32>
    %124 = arith.mulf %123, %123 : vector<2x8x32xf32>
    %cst_34 = arith.constant dense<0.000000e+00> : vector<2x8xf32>
    %125 = vector.multi_reduction <add>, %124, %cst_34 [2] : vector<2x8x32xf32> to vector<2x8xf32>
    %126 = vector.shape_cast %125 : vector<2x8xf32> to vector<2x8x1xf32>
    %cst_35 = arith.constant 3.200000e+01 : f32
    %127 = vector.broadcast %cst_35 : f32 to vector<2x8x1xf32>
    %128 = arith.divf %126, %127 : vector<2x8x1xf32>
    %129 = vector.broadcast %121 : vector<2x8x1xf32> to vector<2x8x32xf32>
    %130 = arith.subf %117, %129 : vector<2x8x32xf32>
    %cst_36 = arith.constant 9.99999974E-6 : f32
    %131 = vector.broadcast %cst_36 : f32 to vector<2x8x1xf32>
    %132 = arith.addf %128, %131 : vector<2x8x1xf32>
    %133 = math.rsqrt %132 : vector<2x8x1xf32>
    %134 = vector.broadcast %133 : vector<2x8x1xf32> to vector<2x8x32xf32>
    %135 = arith.mulf %130, %134 : vector<2x8x32xf32>
    %136 = vector.shape_cast %10 : vector<32xf32> to vector<1x1x32xf32>
    %137 = vector.broadcast %136 : vector<1x1x32xf32> to vector<2x8x32xf32>
    %138 = arith.mulf %135, %137 : vector<2x8x32xf32>
    %139 = vector.shape_cast %12 : vector<32xf32> to vector<1x1x32xf32>
    %140 = vector.broadcast %139 : vector<1x1x32xf32> to vector<2x8x32xf32>
    %141 = arith.addf %138, %140 : vector<2x8x32xf32>
    %142 = vector.shape_cast %141 : vector<2x8x32xf32> to vector<16x32xf32>
    %143 = arith.truncf %142 : vector<16x32xf32> to vector<16x32xbf16>
    %c0_37 = arith.constant 0 : index
    %c0_38 = arith.constant 0 : index
    %c0_39 = arith.constant 0 : index
    %144 = vector.load %arg9[%c0_37, %c0_38, %c0_39] : memref<1x32x128xbf16, #tpu.memory_space<vmem>>, vector<1x32x128xbf16>
    %145 = vector.shape_cast %144 : vector<1x32x128xbf16> to vector<32x128xbf16>
    %cst_40 = arith.constant dense<0.000000e+00> : vector<16x128xf32>
    %146 = tpu.matmul %143, %145, %cst_40 {dimension_numbers = #tpu.dot_dimension_numbers<[1], [0], [0], [1], [0, 0, 1, 1], [], []>} : vector<16x32xbf16>, vector<32x128xbf16>, vector<16x128xf32> -> vector<16x128xf32>
    %147 = vector.shape_cast %20 : vector<128xf32> to vector<1x128xf32>
    %148 = vector.broadcast %147 : vector<1x128xf32> to vector<16x128xf32>
    %149 = arith.addf %146, %148 : vector<16x128xf32>
    %cst_41 = arith.constant 0.000000e+00 : f32
    %150 = vector.broadcast %cst_41 : f32 to vector<16x128xf32>
    %151 = arith.maximumf %149, %150 : vector<16x128xf32>
    %152 = arith.truncf %151 : vector<16x128xf32> to vector<16x128xbf16>
    %c0_42 = arith.constant 0 : index
    %c0_43 = arith.constant 0 : index
    %c0_44 = arith.constant 0 : index
    %153 = vector.load %arg10[%c0_42, %c0_43, %c0_44] : memref<1x128x32xbf16, #tpu.memory_space<vmem>>, vector<1x128x32xbf16>
    %154 = vector.shape_cast %153 : vector<1x128x32xbf16> to vector<128x32xbf16>
    %cst_45 = arith.constant dense<0.000000e+00> : vector<16x32xf32>
    %155 = tpu.matmul %152, %154, %cst_45 {dimension_numbers = #tpu.dot_dimension_numbers<[1], [0], [0], [1], [0, 0, 1, 1], [], []>} : vector<16x128xbf16>, vector<128x32xbf16>, vector<16x32xf32> -> vector<16x32xf32>
    %156 = vector.shape_cast %16 : vector<32xf32> to vector<1x32xf32>
    %157 = vector.broadcast %156 : vector<1x32xf32> to vector<16x32xf32>
    %158 = arith.addf %155, %157 : vector<16x32xf32>
    %159 = vector.shape_cast %158 : vector<16x32xf32> to vector<2x8x32xf32>
    %160 = vector.shape_cast %21 : vector<2x8xf32> to vector<2x8x1xf32>
    %cst_46 = arith.constant 5.000000e-01 : f32
    %161 = vector.broadcast %cst_46 : f32 to vector<2x8x1xf32>
    %162 = arith.cmpf ogt, %160, %161 : vector<2x8x1xf32>
    %cst_47 = arith.constant 0.000000e+00 : f32
    %163 = vector.shape_cast %162 : vector<2x8x1xi1> to vector<2x8x1xi1>
    %164 = vector.broadcast %163 : vector<2x8x1xi1> to vector<2x8x32xi1>
    %165 = vector.broadcast %cst_47 : f32 to vector<2x8x32xf32>
    %166 = arith.select %164, %165, %159 : vector<2x8x32xi1>, vector<2x8x32xf32>
    %167 = arith.addf %166, %141 : vector<2x8x32xf32>
    %c0_48 = arith.constant 0 : index
    %c0_49 = arith.constant 0 : index
    %c0_50 = arith.constant 0 : index
    %168 = vector.load %arg15[%c0_48, %c0_49, %c0_50] : memref<2x8x32xf32, #tpu.memory_space<vmem>>, vector<2x8x32xf32>
    tpu.vector_store %arg15[%c0_48, %c0_49, %c0_50], %167 {strides = array<i32>} : memref<2x8x32xf32, #tpu.memory_space<vmem>>, vector<2x8x32xf32>,
    %c1_i32 = arith.constant 1 : i32
    %169 = arith.cmpi eq, %arg1, %c1_i32 : i32
    %170 = arith.extui %169 : i1 to i32
    %c0_i32_51 = arith.constant 0 : i32
    %171 = arith.cmpi ne, %170, %c0_i32_51 : i32
    scf.if %171 {
      %c0_52 = arith.constant 0 : index
      %c0_53 = arith.constant 0 : index
      %172 = vector.load %arg11[%c0_52, %c0_53] : memref<2x32xf32, #tpu.memory_space<vmem>>, vector<2x32xf32>
      %c0_54 = arith.constant 0 : index
      %c0_55 = arith.constant 0 : index
      %c0_56 = arith.constant 0 : index
      %173 = vector.load %arg15[%c0_54, %c0_55, %c0_56] : memref<2x8x32xf32, #tpu.memory_space<vmem>>, vector<2x8x32xf32>
      %174 = vector.extract_strided_slice %172 {offsets = [0, 0], sizes = [1, 32], strides = [1, 1]} : vector<2x32xf32> to vector<1x32xf32>
      %175 = vector.shape_cast %174 : vector<1x32xf32> to vector<32xf32>
      %176 = vector.extract_strided_slice %172 {offsets = [1, 0], sizes = [1, 32], strides = [1, 1]} : vector<2x32xf32> to vector<1x32xf32>
      %177 = vector.shape_cast %176 : vector<1x32xf32> to vector<32xf32>
      %cst_57 = arith.constant dense<0.000000e+00> : vector<2x8xf32>
      %178 = vector.multi_reduction <add>, %173, %cst_57 [2] : vector<2x8x32xf32> to vector<2x8xf32>
      %179 = vector.shape_cast %178 : vector<2x8xf32> to vector<2x8x1xf32>
      %cst_58 = arith.constant 3.200000e+01 : f32
      %180 = vector.broadcast %cst_58 : f32 to vector<2x8x1xf32>
      %181 = arith.divf %179, %180 : vector<2x8x1xf32>
      %182 = vector.broadcast %181 : vector<2x8x1xf32> to vector<2x8x32xf32>
      %183 = arith.subf %173, %182 : vector<2x8x32xf32>
      %184 = arith.mulf %183, %183 : vector<2x8x32xf32>
      %cst_59 = arith.constant dense<0.000000e+00> : vector<2x8xf32>
      %185 = vector.multi_reduction <add>, %184, %cst_59 [2] : vector<2x8x32xf32> to vector<2x8xf32>
      %186 = vector.shape_cast %185 : vector<2x8xf32> to vector<2x8x1xf32>
      %cst_60 = arith.constant 3.200000e+01 : f32
      %187 = vector.broadcast %cst_60 : f32 to vector<2x8x1xf32>
      %188 = arith.divf %186, %187 : vector<2x8x1xf32>
      %189 = vector.broadcast %181 : vector<2x8x1xf32> to vector<2x8x32xf32>
      %190 = arith.subf %173, %189 : vector<2x8x32xf32>
      %cst_61 = arith.constant 9.99999974E-6 : f32
      %191 = vector.broadcast %cst_61 : f32 to vector<2x8x1xf32>
      %192 = arith.addf %188, %191 : vector<2x8x1xf32>
      %193 = math.rsqrt %192 : vector<2x8x1xf32>
      %194 = vector.broadcast %193 : vector<2x8x1xf32> to vector<2x8x32xf32>
      %195 = arith.mulf %190, %194 : vector<2x8x32xf32>
      %196 = vector.shape_cast %175 : vector<32xf32> to vector<1x1x32xf32>
      %197 = vector.broadcast %196 : vector<1x1x32xf32> to vector<2x8x32xf32>
      %198 = arith.mulf %195, %197 : vector<2x8x32xf32>
      %199 = vector.shape_cast %177 : vector<32xf32> to vector<1x1x32xf32>
      %200 = vector.broadcast %199 : vector<1x1x32xf32> to vector<2x8x32xf32>
      %201 = arith.addf %198, %200 : vector<2x8x32xf32>
      %cst_62 = arith.constant dense<0.000000e+00> : vector<2x32xf32>
      %202 = vector.multi_reduction <add>, %201, %cst_62 [1] : vector<2x8x32xf32> to vector<2x32xf32>
      %cst_63 = arith.constant 1.250000e-01 : f32
      %203 = vector.broadcast %cst_63 : f32 to vector<2x32xf32>
      %204 = arith.mulf %202, %203 : vector<2x32xf32>
      %205 = arith.truncf %204 : vector<2x32xf32> to vector<2x32xbf16>
      %c0_64 = arith.constant 0 : index
      %c0_65 = arith.constant 0 : index
      %206 = vector.load %arg12[%c0_64, %c0_65] : memref<32x8xbf16, #tpu.memory_space<vmem>>, vector<32x8xbf16>
      %cst_66 = arith.constant dense<0.000000e+00> : vector<2x8xf32>
      %207 = tpu.matmul %205, %206, %cst_66 {dimension_numbers = #tpu.dot_dimension_numbers<[1], [0], [0], [1], [0, 0, 1, 1], [], []>} : vector<2x32xbf16>, vector<32x8xbf16>, vector<2x8xf32> -> vector<2x8xf32>
      %c0_67 = arith.constant 0 : index
      %c0_68 = arith.constant 0 : index
      %208 = vector.load %arg13[%c0_67, %c0_68] : memref<1x8xf32, #tpu.memory_space<vmem>>, vector<1x8xf32>
      %209 = vector.broadcast %208 : vector<1x8xf32> to vector<2x8xf32>
      %210 = arith.addf %207, %209 : vector<2x8xf32>
      %c0_69 = arith.constant 0 : index
      %c0_70 = arith.constant 0 : index
      %211 = vector.load %arg14[%c0_69, %c0_70] : memref<2x8xf32, #tpu.memory_space<vmem>>, vector<2x8xf32>
      tpu.vector_store %arg14[%c0_69, %c0_70], %210 {strides = array<i32>} : memref<2x8xf32, #tpu.memory_space<vmem>>, vector<2x8xf32>,
    } else {
    }
    return
  }
  func.func @transform_0(%arg0: i32, %arg1: i32) -> (i32, i32, i32) {
    %c0_i32 = arith.constant 0 : i32
    %c0_i32_0 = arith.constant 0 : i32
    %c0_i32_1 = arith.constant 0 : i32
    return %arg0, %c0_i32, %c0_i32_0 : i32, i32, i32
  }
  func.func @transform_1(%arg0: i32, %arg1: i32) -> (i32, i32, i32) {
    %c0_i32 = arith.constant 0 : i32
    %c0_i32_0 = arith.constant 0 : i32
    %c0_i32_1 = arith.constant 0 : i32
    return %arg0, %c0_i32, %c0_i32_0 : i32, i32, i32
  }
  func.func @transform_2(%arg0: i32, %arg1: i32) -> (i32, i32) {
    %c0_i32 = arith.constant 0 : i32
    %c0_i32_0 = arith.constant 0 : i32
    return %arg0, %c0_i32 : i32, i32
  }
  func.func @transform_3(%arg0: i32, %arg1: i32) -> (i32, i32) {
    %c0_i32 = arith.constant 0 : i32
    %c0_i32_0 = arith.constant 0 : i32
    %c0_i32_1 = arith.constant 0 : i32
    return %c0_i32, %c0_i32_0 : i32, i32
  }
  func.func @transform_4(%arg0: i32, %arg1: i32) -> (i32, i32, i32) {
    %c0_i32 = arith.constant 0 : i32
    %c0_i32_0 = arith.constant 0 : i32
    %c0_i32_1 = arith.constant 0 : i32
    return %arg1, %c0_i32, %c0_i32_0 : i32, i32, i32
  }
  func.func @transform_5(%arg0: i32, %arg1: i32) -> (i32, i32, i32) {
    %c0_i32 = arith.constant 0 : i32
    %c0_i32_0 = arith.constant 0 : i32
    %c0_i32_1 = arith.constant 0 : i32
    return %arg1, %c0_i32, %c0_i32_0 : i32, i32, i32
  }
  func.func @transform_6(%arg0: i32, %arg1: i32) -> (i32, i32, i32) {
    %c0_i32 = arith.constant 0 : i32
    %c0_i32_0 = arith.constant 0 : i32
    %c0_i32_1 = arith.constant 0 : i32
    return %arg1, %c0_i32, %c0_i32_0 : i32, i32, i32
  }
  func.func @transform_7(%arg0: i32, %arg1: i32) -> (i32, i32, i32) {
    %c0_i32 = arith.constant 0 : i32
    %c0_i32_0 = arith.constant 0 : i32
    %c0_i32_1 = arith.constant 0 : i32
    return %arg1, %c0_i32, %c0_i32_0 : i32, i32, i32
  }
  func.func @transform_8(%arg0: i32, %arg1: i32) -> (i32, i32, i32) {
    %c0_i32 = arith.constant 0 : i32
    %c0_i32_0 = arith.constant 0 : i32
    %c0_i32_1 = arith.constant 0 : i32
    return %arg1, %c0_i32, %c0_i32_0 : i32, i32, i32
  }
  func.func @transform_9(%arg0: i32, %arg1: i32) -> (i32, i32) {
    %c0_i32 = arith.constant 0 : i32
    %c0_i32_0 = arith.constant 0 : i32
    %c0_i32_1 = arith.constant 0 : i32
    return %c0_i32, %c0_i32_0 : i32, i32
  }
  func.func @transform_10(%arg0: i32, %arg1: i32) -> (i32, i32) {
    %c0_i32 = arith.constant 0 : i32
    %c0_i32_0 = arith.constant 0 : i32
    %c0_i32_1 = arith.constant 0 : i32
    return %c0_i32, %c0_i32_0 : i32, i32
  }
  func.func @transform_11(%arg0: i32, %arg1: i32) -> (i32, i32) {
    %c0_i32 = arith.constant 0 : i32
    %c0_i32_0 = arith.constant 0 : i32
    %c0_i32_1 = arith.constant 0 : i32
    return %c0_i32, %c0_i32_0 : i32, i32
  }
  func.func @transform_12(%arg0: i32, %arg1: i32) -> (i32, i32) {
    %c0_i32 = arith.constant 0 : i32
    %c0_i32_0 = arith.constant 0 : i32
    return %arg0, %c0_i32 : i32, i32
  }
}

</mosaic_0001>

<llo_original>
// kernel: tpu_custom_call.1
$region0: #{tpu_custom_call.1}
  #allocation0 [shape = 'u32[]', space=smem, size = 0x4, offset = 0x4, fixed_abs, tag = 'smem constant byte address 0x4 - core index']
  #allocation1 [shape = 'u32[72,128]{1,0:T(1,128)}', space=vmem, size = 0x9000, scoped, tag = 'internal scratch']
  #allocation2 [shape = 'f32[2,8,32]{2,1,0:T(8,128)}', space=vmem, size = 0x2000, scoped, tag = 'scratch operand']
  %s0 = inlined_call_operand.vmem [shape: bf16[2,8,32], index: 0, kind: input, shape index: {}]
  %s1 = inlined_call_operand.vmem [shape: bf16[2,8,32], index: 1, kind: input, shape index: {}]
  %s2 = inlined_call_operand.vmem [shape: f32[2,8], index: 2, kind: input, shape index: {}]
  %s3 = inlined_call_operand.vmem [shape: f32[8,8], index: 3, kind: input, shape index: {}]
  %s4 = inlined_call_operand.vmem [shape: f32[2,8,128], index: 4, kind: input, shape index: {}]
  %s5 = inlined_call_operand.vmem [shape: bf16[2,32,96], index: 5, kind: input, shape index: {}]
  %s6 = inlined_call_operand.vmem [shape: bf16[2,32,32], index: 6, kind: input, shape index: {}]
  %s7 = inlined_call_operand.vmem [shape: bf16[2,32,128], index: 7, kind: input, shape index: {}]
  %s8 = inlined_call_operand.vmem [shape: bf16[2,128,32], index: 8, kind: input, shape index: {}]
  %s9 = inlined_call_operand.vmem [shape: f32[2,32], index: 9, kind: input, shape index: {}]
  %s10 = inlined_call_operand.vmem [shape: bf16[32,8], index: 10, kind: input, shape index: {}]
  %s11 = inlined_call_operand.vmem [shape: f32[1,8], index: 11, kind: input, shape index: {}]
  %s12 = inlined_call_operand.hbm [shape: f32[2,8], index: 12, kind: output, shape index: {}]
  %s13 = sld [smem:[#allocation0]]
  $region89: #{tpu_custom_call.1} parent=0
    _
  %s15 = ssub.s32 1, %s13
  %s16 = scalar_select 0, %s15, %s13
  $region1: #{tpu_custom_call.1} parent=0
    #allocation3 [shape = 'u8[1024]{0}', space=vmem, size = 0x400, scoped, tag = 'output window, operand 0, single buffered']
    #allocation4 [shape = 's32[2]{0}', space=sflag, size = 0x8, scoped, tag = 'scoped memory for tpu_custom_call.1']
    %17 = vsyncpa [#allocation4], 0
    loop: start=0, step=1, limit=4
    $region2: #{tpu_custom_call.1} parent=1 // loop_pre_header
      _
    $region3: #{tpu_custom_call.1} parent=1 // loop_header
      %s19 = sphi 0, %s23
      %p20 = scmp.ge.s32.totalorder %s19, 4
      %s26 = sphi 0, %s38
      %s27 = sphi 0, %s34
      %s28 = sphi 0, %s26
      %s29 = sphi 0, %s27
      %s30 = sphi 0, %s28
      %s31 = sphi 0, %s29
      %s41 = sphi 0, %s43
      %s44 = sphi 0, %s41
      %s45 = sphi 0, %s44
      %s61 = sphi 0, %s45
      %s67 = sphi 0, %s69
      %s70 = sphi 0, %s67
      %s71 = sphi 0, %s70
      %s87 = sphi 0, %s71
      %s93 = sphi 0, %s95
      %s96 = sphi 0, %s93
      %s97 = sphi 0, %s96
      %s113 = sphi 0, %s97
      %s117 = sphi 0, %s117
      %s119 = sphi 0, %s117
      %s120 = sphi 0, %s119
      %s134 = sphi 0, %s120
      %s140 = sphi 0, %s142
      %s143 = sphi 0, %s140
      %s144 = sphi 0, %s143
      %s160 = sphi 0, %s144
      %s166 = sphi 0, %s168
      %s169 = sphi 0, %s166
      %s170 = sphi 0, %s169
      %s186 = sphi 0, %s170
      %s192 = sphi 0, %s194
      %s195 = sphi 0, %s192
      %s196 = sphi 0, %s195
      %s212 = sphi 0, %s196
      %s218 = sphi 0, %s220
      %s221 = sphi 0, %s218
      %s222 = sphi 0, %s221
      %s238 = sphi 0, %s222
      %s244 = sphi 0, %s246
      %s247 = sphi 0, %s244
      %s248 = sphi 0, %s247
      %s264 = sphi 0, %s248
      %s268 = sphi 0, %s268
      %s270 = sphi 0, %s268
      %s271 = sphi 0, %s270
      %s285 = sphi 0, %s271
      %s289 = sphi 0, %s289
      %s291 = sphi 0, %s289
      %s292 = sphi 0, %s291
      %s306 = sphi 0, %s292
      %s310 = sphi 0, %s310
      %s312 = sphi 0, %s310
      %s313 = sphi 0, %s312
      %s327 = sphi 0, %s313
      %s333 = sphi 0, %s335
      %s336 = sphi 0, %s333
      %s337 = sphi 0, %s336
      %s353 = sphi 0, %s337
    $region4: #{tpu_custom_call.1} parent=1 // loop_header_branch
      %22 = sbr.rel (%p20) target = $region8
    $region5: #{tpu_custom_call.1} parent=1 // loop_body
      %s24 = ssub.s32 %s19, 1
      %s25 = ssub.s32 %s19, 2
      %s32 = sadd.s32 1, %s27
      %p33 = scmp.ge.s32.totalorder %s32, 2
      %s34 = scalar_select %p33, 0, %s32
      %s35 = sadd.s32 1, %s26
      %s36 = scalar_select %p33, %s35, %s26
      %p37 = scmp.ge.s32.totalorder %s36, 1
      %s38 = scalar_select %p37, 0, %s36
      %s39 = ssub.s32 %s26, %s38
      %p40 = scmp.eq.s32.totalorder %s39, 0
      %s42 = sadd.s32 %s41, 1
      %s43 = scalar_select %p40, %s41, %s42
      %p46 = pneg %p40
      %p47 = scmp.eq.s32.totalorder %s19, 1
      %p48 = por %p46, %p47
      %p49 = scmp.ne.s32.totalorder %s41, %s44
      %p50 = scmp.eq.s32.totalorder %s19, 0
      %p51 = por %p49, %p50
      %p52 = scmp.ne.s32.totalorder %s41, %s44
      %p53 = scmp.eq.s32.totalorder %s24, 1
      %p54 = por %p52, %p53
      %p55 = scmp.ne.s32.totalorder %s44, %s45
      %p56 = scmp.eq.s32.totalorder %s24, 0
      %p57 = por %p55, %p56
      %p58 = scmp.ne.s32.totalorder %s44, %s45
      %p59 = scmp.eq.s32.totalorder %s25, 1
      %p60 = por %p58, %p59
      %p62 = scmp.ne.s32.totalorder %s45, %s61
      %p63 = scmp.eq.s32.totalorder %s25, 0
      %p64 = por %p62, %p63
      %s65 = ssub.s32 %s26, %s38
      %p66 = scmp.eq.s32.totalorder %s65, 0
      %s68 = sadd.s32 %s67, 1
      %s69 = scalar_select %p66, %s67, %s68
      %p72 = pneg %p66
      %p73 = scmp.eq.s32.totalorder %s19, 1
      %p74 = por %p72, %p73
      %p75 = scmp.ne.s32.totalorder %s67, %s70
      %p76 = scmp.eq.s32.totalorder %s19, 0
      %p77 = por %p75, %p76
      %p78 = scmp.ne.s32.totalorder %s67, %s70
      %p79 = scmp.eq.s32.totalorder %s24, 1
      %p80 = por %p78, %p79
      %p81 = scmp.ne.s32.totalorder %s70, %s71
      %p82 = scmp.eq.s32.totalorder %s24, 0
      %p83 = por %p81, %p82
      %p84 = scmp.ne.s32.totalorder %s70, %s71
      %p85 = scmp.eq.s32.totalorder %s25, 1
      %p86 = por %p84, %p85
      %p88 = scmp.ne.s32.totalorder %s71, %s87
      %p89 = scmp.eq.s32.totalorder %s25, 0
      %p90 = por %p88, %p89
      %s91 = ssub.s32 %s26, %s38
      %p92 = scmp.eq.s32.totalorder %s91, 0
      %s94 = sadd.s32 %s93, 1
      %s95 = scalar_select %p92, %s93, %s94
      %p98 = pneg %p92
      %p99 = scmp.eq.s32.totalorder %s19, 1
      %p100 = por %p98, %p99
      %p101 = scmp.ne.s32.totalorder %s93, %s96
      %p102 = scmp.eq.s32.totalorder %s19, 0
      %p103 = por %p101, %p102
      %p104 = scmp.ne.s32.totalorder %s93, %s96
      %p105 = scmp.eq.s32.totalorder %s24, 1
      %p106 = por %p104, %p105
      %p107 = scmp.ne.s32.totalorder %s96, %s97
      %p108 = scmp.eq.s32.totalorder %s24, 0
      %p109 = por %p107, %p108
      %p110 = scmp.ne.s32.totalorder %s96, %s97
      %p111 = scmp.eq.s32.totalorder %s25, 1
      %p112 = por %p110, %p111
      %p114 = scmp.ne.s32.totalorder %s97, %s113
      %p115 = scmp.eq.s32.totalorder %s25, 0
      %p116 = por %p114, %p115
      %s118 = sadd.s32 %s117, 1
      %p121 = scmp.eq.s32.totalorder %s19, 1
      %p122 = scmp.ne.s32.totalorder %s117, %s119
      %p123 = scmp.eq.s32.totalorder %s19, 0
      %p124 = por %p122, %p123
      %p125 = scmp.ne.s32.totalorder %s117, %s119
      %p126 = scmp.eq.s32.totalorder %s24, 1
      %p127 = por %p125, %p126
      %p128 = scmp.ne.s32.totalorder %s119, %s120
      %p129 = scmp.eq.s32.totalorder %s24, 0
      %p130 = por %p128, %p129
      %p131 = scmp.ne.s32.totalorder %s119, %s120
      %p132 = scmp.eq.s32.totalorder %s25, 1
      %p133 = por %p131, %p132
      %p135 = scmp.ne.s32.totalorder %s120, %s134
      %p136 = scmp.eq.s32.totalorder %s25, 0
      %p137 = por %p135, %p136
      %s138 = ssub.s32 %s27, %s34
      %p139 = scmp.eq.s32.totalorder %s138, 0
      %s141 = sadd.s32 %s140, 1
      %s142 = scalar_select %p139, %s140, %s141
      %p145 = pneg %p139
      %p146 = scmp.eq.s32.totalorder %s19, 1
      %p147 = por %p145, %p146
      %p148 = scmp.ne.s32.totalorder %s140, %s143
      %p149 = scmp.eq.s32.totalorder %s19, 0
      %p150 = por %p148, %p149
      %p151 = scmp.ne.s32.totalorder %s140, %s143
      %p152 = scmp.eq.s32.totalorder %s24, 1
      %p153 = por %p151, %p152
      %p154 = scmp.ne.s32.totalorder %s143, %s144
      %p155 = scmp.eq.s32.totalorder %s24, 0
      %p156 = por %p154, %p155
      %p157 = scmp.ne.s32.totalorder %s143, %s144
      %p158 = scmp.eq.s32.totalorder %s25, 1
      %p159 = por %p157, %p158
      %p161 = scmp.ne.s32.totalorder %s144, %s160
      %p162 = scmp.eq.s32.totalorder %s25, 0
      %p163 = por %p161, %p162
      %s164 = ssub.s32 %s27, %s34
      %p165 = scmp.eq.s32.totalorder %s164, 0
      %s167 = sadd.s32 %s166, 1
      %s168 = scalar_select %p165, %s166, %s167
      %p171 = pneg %p165
      %p172 = scmp.eq.s32.totalorder %s19, 1
      %p173 = por %p171, %p172
      %p174 = scmp.ne.s32.totalorder %s166, %s169
      %p175 = scmp.eq.s32.totalorder %s19, 0
      %p176 = por %p174, %p175
      %p177 = scmp.ne.s32.totalorder %s166, %s169
      %p178 = scmp.eq.s32.totalorder %s24, 1
      %p179 = por %p177, %p178
      %p180 = scmp.ne.s32.totalorder %s169, %s170
      %p181 = scmp.eq.s32.totalorder %s24, 0
      %p182 = por %p180, %p181
      %p183 = scmp.ne.s32.totalorder %s169, %s170
      %p184 = scmp.eq.s32.totalorder %s25, 1
      %p185 = por %p183, %p184
      %p187 = scmp.ne.s32.totalorder %s170, %s186
      %p188 = scmp.eq.s32.totalorder %s25, 0
      %p189 = por %p187, %p188
      %s190 = ssub.s32 %s27, %s34
      %p191 = scmp.eq.s32.totalorder %s190, 0
      %s193 = sadd.s32 %s192, 1
      %s194 = scalar_select %p191, %s192, %s193
      %p197 = pneg %p191
      %p198 = scmp.eq.s32.totalorder %s19, 1
      %p199 = por %p197, %p198
      %p200 = scmp.ne.s32.totalorder %s192, %s195
      %p201 = scmp.eq.s32.totalorder %s19, 0
      %p202 = por %p200, %p201
      %p203 = scmp.ne.s32.totalorder %s192, %s195
      %p204 = scmp.eq.s32.totalorder %s24, 1
      %p205 = por %p203, %p204
      %p206 = scmp.ne.s32.totalorder %s195, %s196
      %p207 = scmp.eq.s32.totalorder %s24, 0
      %p208 = por %p206, %p207
      %p209 = scmp.ne.s32.totalorder %s195, %s196
      %p210 = scmp.eq.s32.totalorder %s25, 1
      %p211 = por %p209, %p210
      %p213 = scmp.ne.s32.totalorder %s196, %s212
      %p214 = scmp.eq.s32.totalorder %s25, 0
      %p215 = por %p213, %p214
      %s216 = ssub.s32 %s27, %s34
      %p217 = scmp.eq.s32.totalorder %s216, 0
      %s219 = sadd.s32 %s218, 1
      %s220 = scalar_select %p217, %s218, %s219
      %p223 = pneg %p217
      %p224 = scmp.eq.s32.totalorder %s19, 1
      %p225 = por %p223, %p224
      %p226 = scmp.ne.s32.totalorder %s218, %s221
      %p227 = scmp.eq.s32.totalorder %s19, 0
      %p228 = por %p226, %p227
      %p229 = scmp.ne.s32.totalorder %s218, %s221
      %p230 = scmp.eq.s32.totalorder %s24, 1
      %p231 = por %p229, %p230
      %p232 = scmp.ne.s32.totalorder %s221, %s222
      %p233 = scmp.eq.s32.totalorder %s24, 0
      %p234 = por %p232, %p233
      %p235 = scmp.ne.s32.totalorder %s221, %s222
      %p236 = scmp.eq.s32.totalorder %s25, 1
      %p237 = por %p235, %p236
      %p239 = scmp.ne.s32.totalorder %s222, %s238
      %p240 = scmp.eq.s32.totalorder %s25, 0
      %p241 = por %p239, %p240
      %s242 = ssub.s32 %s27, %s34
      %p243 = scmp.eq.s32.totalorder %s242, 0
      %s245 = sadd.s32 %s244, 1
      %s246 = scalar_select %p243, %s244, %s245
      %p249 = pneg %p243
      %p250 = scmp.eq.s32.totalorder %s19, 1
      %p251 = por %p249, %p250
      %p252 = scmp.ne.s32.totalorder %s244, %s247
      %p253 = scmp.eq.s32.totalorder %s19, 0
      %p254 = por %p252, %p253
      %p255 = scmp.ne.s32.totalorder %s244, %s247
      %p256 = scmp.eq.s32.totalorder %s24, 1
      %p257 = por %p255, %p256
      %p258 = scmp.ne.s32.totalorder %s247, %s248
      %p259 = scmp.eq.s32.totalorder %s24, 0
      %p260 = por %p258, %p259
      %p261 = scmp.ne.s32.totalorder %s247, %s248
      %p262 = scmp.eq.s32.totalorder %s25, 1
      %p263 = por %p261, %p262
      %p265 = scmp.ne.s32.totalorder %s248, %s264
      %p266 = scmp.eq.s32.totalorder %s25, 0
      %p267 = por %p265, %p266
      %s269 = sadd.s32 %s268, 1
      %p272 = scmp.eq.s32.totalorder %s19, 1
      %p273 = scmp.ne.s32.totalorder %s268, %s270
      %p274 = scmp.eq.s32.totalorder %s19, 0
      %p275 = por %p273, %p274
      %p276 = scmp.ne.s32.totalorder %s268, %s270
      %p277 = scmp.eq.s32.totalorder %s24, 1
      %p278 = por %p276, %p277
      %p279 = scmp.ne.s32.totalorder %s270, %s271
      %p280 = scmp.eq.s32.totalorder %s24, 0
      %p281 = por %p279, %p280
      %p282 = scmp.ne.s32.totalorder %s270, %s271
      %p283 = scmp.eq.s32.totalorder %s25, 1
      %p284 = por %p282, %p283
      %p286 = scmp.ne.s32.totalorder %s271, %s285
      %p287 = scmp.eq.s32.totalorder %s25, 0
      %p288 = por %p286, %p287
      %s290 = sadd.s32 %s289, 1
      %p293 = scmp.eq.s32.totalorder %s19, 1
      %p294 = scmp.ne.s32.totalorder %s289, %s291
      %p295 = scmp.eq.s32.totalorder %s19, 0
      %p296 = por %p294, %p295
      %p297 = scmp.ne.s32.totalorder %s289, %s291
      %p298 = scmp.eq.s32.totalorder %s24, 1
      %p299 = por %p297, %p298
      %p300 = scmp.ne.s32.totalorder %s291, %s292
      %p301 = scmp.eq.s32.totalorder %s24, 0
      %p302 = por %p300, %p301
      %p303 = scmp.ne.s32.totalorder %s291, %s292
      %p304 = scmp.eq.s32.totalorder %s25, 1
      %p305 = por %p303, %p304
      %p307 = scmp.ne.s32.totalorder %s292, %s306
      %p308 = scmp.eq.s32.totalorder %s25, 0
      %p309 = por %p307, %p308
      %s311 = sadd.s32 %s310, 1
      %p314 = scmp.eq.s32.totalorder %s19, 1
      %p315 = scmp.ne.s32.totalorder %s310, %s312
      %p316 = scmp.eq.s32.totalorder %s19, 0
      %p317 = por %p315, %p316
      %p318 = scmp.ne.s32.totalorder %s310, %s312
      %p319 = scmp.eq.s32.totalorder %s24, 1
      %p320 = por %p318, %p319
      %p321 = scmp.ne.s32.totalorder %s312, %s313
      %p322 = scmp.eq.s32.totalorder %s24, 0
      %p323 = por %p321, %p322
      %p324 = scmp.ne.s32.totalorder %s312, %s313
      %p325 = scmp.eq.s32.totalorder %s25, 1
      %p326 = por %p324, %p325
      %p328 = scmp.ne.s32.totalorder %s313, %s327
      %p329 = scmp.eq.s32.totalorder %s25, 0
      %p330 = por %p328, %p329
      %s331 = ssub.s32 %s26, %s38
      %p332 = scmp.eq.s32.totalorder %s331, 0
      %s334 = sadd.s32 %s333, 1
      %s335 = scalar_select %p332, %s333, %s334
      %p338 = pneg %p332
      %p339 = scmp.eq.s32.totalorder %s19, 1
      %p340 = por %p338, %p339
      %p341 = scmp.ne.s32.totalorder %s333, %s336
      %p342 = scmp.eq.s32.totalorder %s19, 0
      %p343 = por %p341, %p342
      %p344 = scmp.ne.s32.totalorder %s333, %s336
      %p345 = scmp.eq.s32.totalorder %s24, 1
      %p346 = por %p344, %p345
      %p347 = scmp.ne.s32.totalorder %s336, %s337
      %p348 = scmp.eq.s32.totalorder %s24, 0
      %p349 = por %p347, %p348
      %p350 = scmp.ne.s32.totalorder %s336, %s337
      %p351 = scmp.eq.s32.totalorder %s25, 1
      %p352 = por %p350, %p351
      %p354 = scmp.ne.s32.totalorder %s337, %s353
      %p355 = scmp.eq.s32.totalorder %s25, 0
      %p356 = por %p354, %p355
      %p357 = scmp.le.s32.totalorder 1, %s19
      %p358 = scmp.lt.s32.totalorder %s19, 3
      %p359 = pnand %p357, %p358
      %p360 = pneg %p359
      // Predicated region
      $region9: #{tpu_custom_call.1} parent=5 // pred_check
        _
      $region10: #{tpu_custom_call.1} parent=5 // pred_check_branch
        %362 = sbr.rel (%p359) target = $region12
      $region11: #{tpu_custom_call.1} parent=5 // pred_region
        %s363 = ssub.s32 %s19, 1
        // Predicated region
        $region13: #{tpu_custom_call.1} parent=11 // pred_check
          %p364 = pneg %p57
        $region14: #{tpu_custom_call.1} parent=11 // pred_check_branch
          %366 = sbr.rel (%p364) target = $region16
        $region15: #{tpu_custom_call.1} parent=11 // pred_region
          %s367 = smul.u32 2, %s28
          %p368 = scmp.lt.s32.totalorder %s367, 1
          %s369 = scalar_select %p368, %s367, 1
          %s370 = smul.addr %s369, 4
          %s371 = scalar_lea.vmem %s0, %s370
          %s372 = smul.u32 2, %s28
        $region16: #{tpu_custom_call.1} parent=11 // pred_fallthru
          _
        // Predicated region
        $region17: #{tpu_custom_call.1} parent=11 // pred_check
          %p373 = pneg %p83
        $region18: #{tpu_custom_call.1} parent=11 // pred_check_branch
          %375 = sbr.rel (%p373) target = $region20
        $region19: #{tpu_custom_call.1} parent=11 // pred_region
          %s376 = smul.u32 2, %s28
          %p377 = scmp.lt.s32.totalorder %s376, 1
          %s378 = scalar_select %p377, %s376, 1
          %s379 = smul.addr %s378, 4
          %s380 = scalar_lea.vmem %s1, %s379
          %s381 = smul.u32 2, %s28
        $region20: #{tpu_custom_call.1} parent=11 // pred_fallthru
          _
        // Predicated region
        $region21: #{tpu_custom_call.1} parent=11 // pred_check
          %p382 = pneg %p109
        $region22: #{tpu_custom_call.1} parent=11 // pred_check_branch
          %384 = sbr.rel (%p382) target = $region24
        $region23: #{tpu_custom_call.1} parent=11 // pred_region
          %p385 = scmp.lt.s32.totalorder %s28, 0
          %s386 = scalar_select %p385, %s28, 0
          %s387 = smul.addr %s386, 2
          %s388 = scalar_lea.vmem %s2, %s387
        $region24: #{tpu_custom_call.1} parent=11 // pred_fallthru
          _
        // Predicated region
        $region25: #{tpu_custom_call.1} parent=11 // pred_check
          %p389 = pneg %p130
        $region26: #{tpu_custom_call.1} parent=11 // pred_check_branch
          %391 = sbr.rel (%p389) target = $region28
        $region27: #{tpu_custom_call.1} parent=11 // pred_region
          _
        $region28: #{tpu_custom_call.1} parent=11 // pred_fallthru
          _
        // Predicated region
        $region29: #{tpu_custom_call.1} parent=11 // pred_check
          %p392 = pneg %p281
        $region30: #{tpu_custom_call.1} parent=11 // pred_check_branch
          %394 = sbr.rel (%p392) target = $region32
        $region31: #{tpu_custom_call.1} parent=11 // pred_region
          _
        $region32: #{tpu_custom_call.1} parent=11 // pred_fallthru
          _
        // Predicated region
        $region33: #{tpu_custom_call.1} parent=11 // pred_check
          %p395 = pneg %p302
        $region34: #{tpu_custom_call.1} parent=11 // pred_check_branch
          %397 = sbr.rel (%p395) target = $region36
        $region35: #{tpu_custom_call.1} parent=11 // pred_region
          _
        $region36: #{tpu_custom_call.1} parent=11 // pred_fallthru
          _
        // Predicated region
        $region37: #{tpu_custom_call.1} parent=11 // pred_check
          %p398 = pneg %p323
        $region38: #{tpu_custom_call.1} parent=11 // pred_check_branch
          %400 = sbr.rel (%p398) target = $region40
        $region39: #{tpu_custom_call.1} parent=11 // pred_region
          _
        $region40: #{tpu_custom_call.1} parent=11 // pred_fallthru
          _
      $region12: #{tpu_custom_call.1} parent=5 // pred_fallthru
        _
      %p401 = scmp.lt.s32.totalorder %s19, 2
      // Predicated region
      $region41: #{tpu_custom_call.1} parent=5 // pred_check
        %p402 = pneg %p401
      $region42: #{tpu_custom_call.1} parent=5 // pred_check_branch
        %404 = sbr.rel (%p402) target = $region44
      $region43: #{tpu_custom_call.1} parent=5 // pred_region
        // Predicated region
        $region45: #{tpu_custom_call.1} parent=43 // pred_check
          %p405 = pneg %p150
        $region46: #{tpu_custom_call.1} parent=43 // pred_check_branch
          %407 = sbr.rel (%p405) target = $region48
        $region47: #{tpu_custom_call.1} parent=43 // pred_region
          %p408 = scmp.lt.s32.totalorder %s27, 1
          %s409 = scalar_select %p408, %s27, 1
          %s410 = smul.addr %s409, 8
          %s411 = scalar_lea.vmem %s4, %s410
        $region48: #{tpu_custom_call.1} parent=43 // pred_fallthru
          _
        // Predicated region
        $region49: #{tpu_custom_call.1} parent=43 // pred_check
          %p412 = pneg %p176
        $region50: #{tpu_custom_call.1} parent=43 // pred_check_branch
          %414 = sbr.rel (%p412) target = $region52
        $region51: #{tpu_custom_call.1} parent=43 // pred_region
          %p415 = scmp.lt.s32.totalorder %s27, 1
          %s416 = scalar_select %p415, %s27, 1
          %s417 = smul.addr %s416, 4
          %s418 = smul.addr %s417, 4
          %s419 = scalar_lea.vmem %s5, %s418
        $region52: #{tpu_custom_call.1} parent=43 // pred_fallthru
          _
        // Predicated region
        $region53: #{tpu_custom_call.1} parent=43 // pred_check
          %p420 = pneg %p202
        $region54: #{tpu_custom_call.1} parent=43 // pred_check_branch
          %422 = sbr.rel (%p420) target = $region56
        $region55: #{tpu_custom_call.1} parent=43 // pred_region
          %p423 = scmp.lt.s32.totalorder %s27, 1
          %s424 = scalar_select %p423, %s27, 1
          %s425 = smul.addr %s424, 4
          %s426 = smul.addr %s425, 4
          %s427 = scalar_lea.vmem %s6, %s426
        $region56: #{tpu_custom_call.1} parent=43 // pred_fallthru
          _
        // Predicated region
        $region57: #{tpu_custom_call.1} parent=43 // pred_check
          %p428 = pneg %p228
        $region58: #{tpu_custom_call.1} parent=43 // pred_check_branch
          %430 = sbr.rel (%p428) target = $region60
        $region59: #{tpu_custom_call.1} parent=43 // pred_region
          %p431 = scmp.lt.s32.totalorder %s27, 1
          %s432 = scalar_select %p431, %s27, 1
          %s433 = smul.addr %s432, 4
          %s434 = smul.addr %s433, 4
          %s435 = scalar_lea.vmem %s7, %s434
        $region60: #{tpu_custom_call.1} parent=43 // pred_fallthru
          _
        // Predicated region
        $region61: #{tpu_custom_call.1} parent=43 // pred_check
          %p436 = pneg %p254
        $region62: #{tpu_custom_call.1} parent=43 // pred_check_branch
          %438 = sbr.rel (%p436) target = $region64
        $region63: #{tpu_custom_call.1} parent=43 // pred_region
          %p439 = scmp.lt.s32.totalorder %s27, 1
          %s440 = scalar_select %p439, %s27, 1
          %s441 = smul.addr %s440, 16
          %s442 = smul.addr %s441, 4
          %s443 = scalar_lea.vmem %s8, %s442
        $region64: #{tpu_custom_call.1} parent=43 // pred_fallthru
          _
      $region44: #{tpu_custom_call.1} parent=5 // pred_fallthru
        _
      %p444 = scmp.le.s32.totalorder 1, %s19
      %p445 = scmp.lt.s32.totalorder %s19, 3
      %p446 = pnand %p444, %p445
      %p447 = pneg %p446
      // Predicated region
      $region65: #{tpu_custom_call.1} parent=5 // pred_check
        _
      $region66: #{tpu_custom_call.1} parent=5 // pred_check_branch
        %449 = sbr.rel (%p446) target = $region68
      $region67: #{tpu_custom_call.1} parent=5 // pred_region
        %s450 = ssub.s32 %s19, 1
        %s451 = smul.u32 2, %s28
        %p452 = scmp.lt.s32.totalorder %s451, 1
        %s453 = scalar_select %p452, %s451, 1
        %s454 = smul.addr %s453, 4
        %s455 = scalar_lea.vmem %s0, %s454
        %p456 = pneg %p57
        %p457 = pneg %p54
        %s458 = smul.u32 2, %s28
        %p459 = scmp.lt.s32.totalorder %s458, 1
        %s460 = scalar_select %p459, %s458, 1
        %s461 = smul.addr %s460, 4
        %s462 = scalar_lea.vmem %s1, %s461
        %p463 = pneg %p83
        %p464 = pneg %p80
        %p465 = scmp.lt.s32.totalorder %s28, 0
        %s466 = scalar_select %p465, %s28, 0
        %s467 = smul.addr %s466, 2
        %s468 = scalar_lea.vmem %s2, %s467
        %p469 = pneg %p109
        %p470 = pneg %p106
        %p471 = pneg %p130
        %p472 = pneg %p127
        %p473 = scmp.lt.s32.totalorder %s29, 1
        %s474 = scalar_select %p473, %s29, 1
        %s475 = smul.addr %s474, 8
        %s476 = scalar_lea.vmem %s4, %s475
        %p477 = pneg %p156
        %p478 = pneg %p153
        %p479 = scmp.lt.s32.totalorder %s29, 1
        %s480 = scalar_select %p479, %s29, 1
        %s481 = smul.addr %s480, 4
        %s482 = smul.addr %s481, 4
        %s483 = scalar_lea.vmem %s5, %s482
        %p484 = pneg %p182
        %p485 = pneg %p179
        %p486 = scmp.lt.s32.totalorder %s29, 1
        %s487 = scalar_select %p486, %s29, 1
        %s488 = smul.addr %s487, 4
        %s489 = smul.addr %s488, 4
        %s490 = scalar_lea.vmem %s6, %s489
        %p491 = pneg %p208
        %p492 = pneg %p205
        %p493 = scmp.lt.s32.totalorder %s29, 1
        %s494 = scalar_select %p493, %s29, 1
        %s495 = smul.addr %s494, 4
        %s496 = smul.addr %s495, 4
        %s497 = scalar_lea.vmem %s7, %s496
        %p498 = pneg %p234
        %p499 = pneg %p231
        %p500 = scmp.lt.s32.totalorder %s29, 1
        %s501 = scalar_select %p500, %s29, 1
        %s502 = smul.addr %s501, 16
        %s503 = smul.addr %s502, 4
        %s504 = scalar_lea.vmem %s8, %s503
        %p505 = pneg %p260
        %p506 = pneg %p257
        %p507 = pneg %p281
        %p508 = pneg %p278
        %p509 = pneg %p302
        %p510 = pneg %p299
        %p511 = pneg %p323
        %p512 = pneg %p320
        %p513 = pneg %p349
        %p514 = pneg %p346
        %s515 = smul.u32 2, %s28
        %p516 = scmp.lt.s32.totalorder %s515, 1
        %s517 = scalar_select %p516, %s515, 1
        %s518 = smul.addr %s517, 4
        %s519 = scalar_lea.vmem %s0, %s518
        %s520 = smul.u32 2, %s28
        %s521 = smul.u32 2, %s28
        %p522 = scmp.lt.s32.totalorder %s521, 1
        %s523 = scalar_select %p522, %s521, 1
        %s524 = smul.addr %s523, 4
        %s525 = scalar_lea.vmem %s1, %s524
        %s526 = smul.u32 2, %s28
        %p527 = scmp.lt.s32.totalorder %s28, 0
        %s528 = scalar_select %p527, %s28, 0
        %s529 = smul.addr %s528, 2
        %s530 = scalar_lea.vmem %s2, %s529
        %p531 = scmp.lt.s32.totalorder %s29, 1
        %s532 = scalar_select %p531, %s29, 1
        %s533 = smul.addr %s532, 8
        %s534 = scalar_lea.vmem %s4, %s533
        %p535 = scmp.lt.s32.totalorder %s29, 1
        %s536 = scalar_select %p535, %s29, 1
        %s537 = smul.addr %s536, 4
        %s538 = smul.addr %s537, 4
        %s539 = scalar_lea.vmem %s5, %s538
        %p540 = scmp.lt.s32.totalorder %s29, 1
        %s541 = scalar_select %p540, %s29, 1
        %s542 = smul.addr %s541, 4
        %s543 = smul.addr %s542, 4
        %s544 = scalar_lea.vmem %s6, %s543
        %p545 = scmp.lt.s32.totalorder %s29, 1
        %s546 = scalar_select %p545, %s29, 1
        %s547 = smul.addr %s546, 4
        %s548 = smul.addr %s547, 4
        %s549 = scalar_lea.vmem %s7, %s548
        %p550 = scmp.lt.s32.totalorder %s29, 1
        %s551 = scalar_select %p550, %s29, 1
        %s552 = smul.addr %s551, 16
        %s553 = smul.addr %s552, 4
        %s554 = scalar_lea.vmem %s8, %s553
        %p556 = scmp.eq.s32.totalorder %s29, 0
        // Predicated region
        $region69: #{tpu_custom_call.1} parent=67 // pred_check
          %p557 = pneg %p556
        $region70: #{tpu_custom_call.1} parent=67 // pred_check_branch
          %559 = sbr.rel (%p557) target = $region72
        $region71: #{tpu_custom_call.1} parent=67 // pred_region
          %v560 = vld [vmem:[%s519] sm:$0xf]
          %v561 = vld [vmem:[%s519 + $0x4] sm:$0xf]
          %v562 = vunpack.c.l.bf16 %v560
          %v563 = vunpack.c.l.bf16 %v561
          %vm564 = vcmask 261120
          %565 = vst.msk [vmem:[#allocation2] sm:$0xff] %vm564, %v562
          %566 = vst.msk [vmem:[#allocation2 + $0x8] sm:$0xff] %vm564, %v563
        $region72: #{tpu_custom_call.1} parent=67 // pred_fallthru
          _
        %v567 = vld [vmem:[%s534] sm:$0xff]
        %v568 = vld [vmem:[%s530] sm:$0x3]
        %v569 = vmul.f32 %v568, -1e+09
        %v570 = vperm.slane %v569, 0
        %v571 = vlaneseq
        %v572 = vshrl.u32 %v571, 7
        %574 = vset.pattern.permute.xlu0 %v572
        %575 = vperm.xlu0 %574, %v570
        %v576 = vpop.permute.xlu0 %575
        %v577 = vperm.slane %v569, 1
        %v578 = vlaneseq
        %v579 = vshrl.u32 %v578, 7
        %581 = vset.pattern.permute.xlu0 %v579
        %582 = vperm.xlu0 %581, %v577
        %v583 = vpop.permute.xlu0 %582
        %v585 = vrot.slane %v569, 1
        %v586 = vperm.slane %v569, 0
        %v587 = vperm.slane %v585, 0
        %v590 = vadd.f32 %v576, %v586
        %v591 = vadd.f32 %v583, %v587
        %v592 = vld [vmem:[%s3] sm:$0xff]
        %v593 = vadd.f32 %v590, %v592
        %v594 = vadd.f32 %v591, %v592
        %v595 = vmax.f32 %v593, -1e+09
        %v596 = vmax.f32 %v594, -1e+09
        %v597 = vld [vmem:[#allocation2] sm:$0xff]
        %v598 = vld [vmem:[#allocation2 + $0x8] sm:$0xff]
        %v599 = vld [vmem:[%s525] sm:$0xf]
        %v600 = vld [vmem:[%s525 + $0x4] sm:$0xf]
        %v601 = vunpack.c.l.bf16 %v599
        %v602 = vunpack.c.l.bf16 %v600
        %v603 = vadd.f32 %v597, %v601
        %v604 = vadd.f32 %v598, %v602
        %vm605 = vcmask 261120
        %v606 = vsel %vm605, %v603, 0.0
        %607 = vadd.xlane.f32.xlu0 %v606
        %v608 = vpop.xlane.xlu0 %607
        %v609 = vsel %vm605, %v604, 0.0
        %610 = vadd.xlane.f32.xlu0 %v609
        %v611 = vpop.xlane.xlu0 %610
        %v612 = vrcp.pop 32.0
        %v613 = vmul.f32 32.0, %v612
        %v614 = vsub.f32 1.0, %v613
        %v615 = vmul.f32 %v612, %v614
        %v616 = vadd.f32 %v612, %v615
        %vm617 = vweird.f32 %v612
        %v618 = vsel %vm617, %v612, %v616
        %v619 = vmul.f32 %v608, %v618
        %v620 = vmul.f32 %v611, %v618
        %v621 = vsub.f32 %v603, %v619
        %v622 = vsub.f32 %v604, %v620
        %v623 = vmul.f32 %v621, %v621
        %v624 = vmul.f32 %v622, %v622
        %v625 = vsel %vm605, %v623, 0.0
        %626 = vadd.xlane.f32.xlu0 %v625
        %v627 = vpop.xlane.xlu0 %626
        %v628 = vsel %vm605, %v624, 0.0
        %629 = vadd.xlane.f32.xlu0 %v628
        %v630 = vpop.xlane.xlu0 %629
        %v631 = vmul.f32 %v627, %v618
        %v632 = vmul.f32 %v630, %v618
        %v633 = vadd.f32 %v631, 1e-05
        %v634 = vadd.f32 %v632, 1e-05
        %v635 = vrsqrt.pop %v633
        %v636 = vmul.f32 %v635, %v633
        %v637 = vmul.f32 %v636, %v635
        %v638 = vmul.f32 0.5, %v637
        %v639 = vsub.f32 1.5, %v638
        %v640 = vmul.f32 %v635, %v639
        %vm641 = vweird.f32 %v633
        %vm642 = vweird.f32 %v635
        %vm643 = vmor %vm641, %vm642
        %v644 = vsel %vm643, %v635, %v640
        %v645 = vrsqrt.pop %v634
        %v646 = vmul.f32 %v645, %v634
        %v647 = vmul.f32 %v646, %v645
        %v648 = vmul.f32 0.5, %v647
        %v649 = vsub.f32 1.5, %v648
        %v650 = vmul.f32 %v645, %v649
        %vm651 = vweird.f32 %v634
        %vm652 = vweird.f32 %v645
        %vm653 = vmor %vm651, %vm652
        %v654 = vsel %vm653, %v645, %v650
        %v655 = vmul.f32 %v621, %v644
        %v656 = vmul.f32 %v622, %v654
        %v657 = vperm.slane %v567, 0
        %v658 = vmul.f32 %v655, %v657
        %v659 = vmul.f32 %v656, %v657
        %v660 = vperm.slane %v567, 1
        %v661 = vadd.f32 %v658, %v660
        %v662 = vadd.f32 %v659, %v660
        %v663 = vpack.c.bf16 %v662, %v661
        %v664 = vld [vmem:[%s539] sm:$0xf]
        %v665 = vld [vmem:[%s539 + $0x4] sm:$0xf]
        %v666 = vld [vmem:[%s539 + $0x8] sm:$0xf]
        %v667 = vld [vmem:[%s539 + $0xc] sm:$0xf]
        %v668 = vperm.slane %v567, 6
        %v673 = vunpack.c.l.b16 %v664
        %v674 = vunpack.c.l.b16 %v665
        %v675 = vunpack.c.l.b16 %v666
        %v676 = vunpack.c.l.b16 %v667
        %v677 = vpack.c.b16 %v674, %v673
        %v678 = vpack.c.b16 %v676, %v675
        %v682 = vsel %vm605, %v663, 0
        %684 = vmatpush.bf16.msra.mxu0 0
        %685 = vmatpush.bf16.msra.mxu0 0
        %686 = vmatpush.bf16.msra.mxu0 0
        %687 = vmatpush.bf16.msra.mxu0 0
        %688 = vmatpush.bf16.msra.mxu0 0
        %689 = vmatpush.bf16.msra.mxu0 0
        %690 = vmatpush.bf16.msra.mxu0 %v678
        %691 = vmatpush.bf16.msra.mxu0 %v677
        %692 = vmatmul.bf16.gmra.mxu0 %v682
        %v693 = vpop.f32.mrf.mxu0
        %v694 = vadd.f32 %v668, %v693
        %v695 = vpop.f32.mrf.mxu0
        %v696 = vadd.f32 %v668, %v695
        %697 = vdwg.mxu0
        %700 = vrot.lane.b32.xlu0 %v694, 120
        %v701 = vpop.permute.xlu0 %700
        %702 = vrot.lane.b32.xlu0 %v696, 120
        %v703 = vpop.permute.xlu0 %702
        %706 = vrot.lane.b32.xlu0 %v694, 112
        %v707 = vpop.permute.xlu0 %706
        %708 = vrot.lane.b32.xlu0 %v696, 112
        %v709 = vpop.permute.xlu0 %708
        %712 = vrot.lane.b32.xlu0 %v694, 104
        %v713 = vpop.permute.xlu0 %712
        %714 = vrot.lane.b32.xlu0 %v696, 104
        %v715 = vpop.permute.xlu0 %714
        %v718 = vrot.slane %v707, 4
        %vm719 = vcmask 1047556
        %v720 = vsel %vm719, %v718, %v694
        %v721 = vrot.slane %v694, 4
        %v722 = vsel %vm719, %v707, %v721
        %v724 = vunpack.c.l.s4 1983009808
        %v725 = vunpack.c.0.s8 %v724
        %v726 = vperm.slane %v720, %v725
        %v728 = vunpack.c.l.s4 1983009808
        %v729 = vunpack.c.0.s8 %v728
        %v730 = vperm.slane %v722, %v729
        %v731 = vrot.slane %v713, 4
        %v732 = vsel %vm719, %v731, %v701
        %v733 = vrot.slane %v701, 4
        %v734 = vsel %vm719, %v713, %v733
        %v736 = vunpack.c.l.s4 1983009808
        %v737 = vunpack.c.0.s8 %v736
        %v738 = vperm.slane %v732, %v737
        %v740 = vunpack.c.l.s4 1983009808
        %v741 = vunpack.c.0.s8 %v740
        %v742 = vperm.slane %v734, %v741
        %v743 = vrot.slane %v738, 4
        %v744 = vsel %vm719, %v743, %v726
        %v745 = vrot.slane %v726, 4
        %v746 = vsel %vm719, %v738, %v745
        %v748 = vunpack.c.l.s4 1934713408
        %v749 = vunpack.c.0.s8 %v748
        %v750 = vperm.slane %v744, %v749
        %v752 = vunpack.c.l.s4 1934713408
        %v753 = vunpack.c.0.s8 %v752
        %v754 = vperm.slane %v746, %v753
        %v755 = vrot.slane %v742, 4
        %v756 = vsel %vm719, %v755, %v730
        %v757 = vrot.slane %v730, 4
        %v758 = vsel %vm719, %v742, %v757
        %v760 = vunpack.c.l.s4 1934713408
        %v761 = vunpack.c.0.s8 %v760
        %v762 = vperm.slane %v756, %v761
        %v764 = vunpack.c.l.s4 1934713408
        %v765 = vunpack.c.0.s8 %v764
        %v766 = vperm.slane %v758, %v765
        %v767 = vrot.slane %v750, 4
        %v768 = vsel %vm719, 0.0, %v767
        %v769 = vrot.slane %v754, 4
        %v770 = vsel %vm719, 0.0, %v769
        %v771 = vrot.slane %v762, 4
        %v772 = vsel %vm719, 0.0, %v771
        %v773 = vrot.slane %v766, 4
        %v774 = vsel %vm719, 0.0, %v773
        %v775 = vrot.slane %v709, 4
        %v776 = vsel %vm719, %v775, %v696
        %v777 = vrot.slane %v696, 4
        %v778 = vsel %vm719, %v709, %v777
        %v780 = vunpack.c.l.s4 1983009808
        %v781 = vunpack.c.0.s8 %v780
        %v782 = vperm.slane %v776, %v781
        %v784 = vunpack.c.l.s4 1983009808
        %v785 = vunpack.c.0.s8 %v784
        %v786 = vperm.slane %v778, %v785
        %v787 = vrot.slane %v715, 4
        %v788 = vsel %vm719, %v787, %v703
        %v789 = vrot.slane %v703, 4
        %v790 = vsel %vm719, %v715, %v789
        %v792 = vunpack.c.l.s4 1983009808
        %v793 = vunpack.c.0.s8 %v792
        %v794 = vperm.slane %v788, %v793
        %v796 = vunpack.c.l.s4 1983009808
        %v797 = vunpack.c.0.s8 %v796
        %v798 = vperm.slane %v790, %v797
        %v799 = vrot.slane %v794, 4
        %v800 = vsel %vm719, %v799, %v782
        %v801 = vrot.slane %v782, 4
        %v802 = vsel %vm719, %v794, %v801
        %v804 = vunpack.c.l.s4 1934713408
        %v805 = vunpack.c.0.s8 %v804
        %v806 = vperm.slane %v800, %v805
        %v808 = vunpack.c.l.s4 1934713408
        %v809 = vunpack.c.0.s8 %v808
        %v810 = vperm.slane %v802, %v809
        %v811 = vrot.slane %v798, 4
        %v812 = vsel %vm719, %v811, %v786
        %v813 = vrot.slane %v786, 4
        %v814 = vsel %vm719, %v798, %v813
        %v816 = vunpack.c.l.s4 1934713408
        %v817 = vunpack.c.0.s8 %v816
        %v818 = vperm.slane %v812, %v817
        %v820 = vunpack.c.l.s4 1934713408
        %v821 = vunpack.c.0.s8 %v820
        %v822 = vperm.slane %v814, %v821
        %v823 = vrot.slane %v806, 4
        %v824 = vsel %vm719, 0.0, %v823
        %v825 = vrot.slane %v810, 4
        %v826 = vsel %vm719, 0.0, %v825
        %v827 = vrot.slane %v818, 4
        %v828 = vsel %vm719, 0.0, %v827
        %v829 = vrot.slane %v822, 4
        %v830 = vsel %vm719, 0.0, %v829
        %v831 = vsel %vm719, %v769, %v750
        %v833 = vunpack.c.l.s4 1983009808
        %v834 = vunpack.c.0.s8 %v833
        %v835 = vperm.slane %v831, %v834
        %v836 = vrot.slane %v770, 4
        %v837 = vsel %vm719, %v836, %v768
        %v839 = vunpack.c.l.s4 1983009808
        %v840 = vunpack.c.0.s8 %v839
        %v841 = vperm.slane %v837, %v840
        %v842 = vsel %vm719, %v773, %v762
        %v844 = vunpack.c.l.s4 1983009808
        %v845 = vunpack.c.0.s8 %v844
        %v846 = vperm.slane %v842, %v845
        %v847 = vrot.slane %v774, 4
        %v848 = vsel %vm719, %v847, %v772
        %v850 = vunpack.c.l.s4 1983009808
        %v851 = vunpack.c.0.s8 %v850
        %v852 = vperm.slane %v848, %v851
        %v853 = vrot.slane %v841, 4
        %v854 = vsel %vm719, %v853, %v835
        %v855 = vrot.slane %v835, 4
        %v856 = vsel %vm719, %v841, %v855
        %v858 = vunpack.c.l.s4 1934713408
        %v859 = vunpack.c.0.s8 %v858
        %v860 = vperm.slane %v854, %v859
        %v862 = vunpack.c.l.s4 1934713408
        %v863 = vunpack.c.0.s8 %v862
        %v864 = vperm.slane %v856, %v863
        %v865 = vrot.slane %v852, 4
        %v866 = vsel %vm719, %v865, %v846
        %v867 = vrot.slane %v846, 4
        %v868 = vsel %vm719, %v852, %v867
        %v870 = vunpack.c.l.s4 1934713408
        %v871 = vunpack.c.0.s8 %v870
        %v872 = vperm.slane %v866, %v871
        %v874 = vunpack.c.l.s4 1934713408
        %v875 = vunpack.c.0.s8 %v874
        %v876 = vperm.slane %v868, %v875
        %v877 = vrot.slane %v872, 4
        %v878 = vsel %vm719, %v877, %v860
        %v879 = vrot.slane %v860, 4
        %v880 = vsel %vm719, %v872, %v879
        %v881 = vrot.slane %v876, 4
        %v882 = vsel %vm719, %v881, %v864
        %v883 = vrot.slane %v864, 4
        %v884 = vsel %vm719, %v876, %v883
        %v885 = vsel %vm719, %v825, %v806
        %v887 = vunpack.c.l.s4 1983009808
        %v888 = vunpack.c.0.s8 %v887
        %v889 = vperm.slane %v885, %v888
        %v890 = vrot.slane %v826, 4
        %v891 = vsel %vm719, %v890, %v824
        %v893 = vunpack.c.l.s4 1983009808
        %v894 = vunpack.c.0.s8 %v893
        %v895 = vperm.slane %v891, %v894
        %v896 = vsel %vm719, %v829, %v818
        %v898 = vunpack.c.l.s4 1983009808
        %v899 = vunpack.c.0.s8 %v898
        %v900 = vperm.slane %v896, %v899
        %v901 = vrot.slane %v830, 4
        %v902 = vsel %vm719, %v901, %v828
        %v904 = vunpack.c.l.s4 1983009808
        %v905 = vunpack.c.0.s8 %v904
        %v906 = vperm.slane %v902, %v905
        %v907 = vrot.slane %v895, 4
        %v908 = vsel %vm719, %v907, %v889
        %v909 = vrot.slane %v889, 4
        %v910 = vsel %vm719, %v895, %v909
        %v912 = vunpack.c.l.s4 1934713408
        %v913 = vunpack.c.0.s8 %v912
        %v914 = vperm.slane %v908, %v913
        %v916 = vunpack.c.l.s4 1934713408
        %v917 = vunpack.c.0.s8 %v916
        %v918 = vperm.slane %v910, %v917
        %v919 = vrot.slane %v906, 4
        %v920 = vsel %vm719, %v919, %v900
        %v921 = vrot.slane %v900, 4
        %v922 = vsel %vm719, %v906, %v921
        %v924 = vunpack.c.l.s4 1934713408
        %v925 = vunpack.c.0.s8 %v924
        %v926 = vperm.slane %v920, %v925
        %v928 = vunpack.c.l.s4 1934713408
        %v929 = vunpack.c.0.s8 %v928
        %v930 = vperm.slane %v922, %v929
        %v931 = vrot.slane %v926, 4
        %v932 = vsel %vm719, %v931, %v914
        %v933 = vrot.slane %v914, 4
        %v934 = vsel %vm719, %v926, %v933
        %v935 = vrot.slane %v930, 4
        %v936 = vsel %vm719, %v935, %v918
        %v937 = vrot.slane %v918, 4
        %v938 = vsel %vm719, %v930, %v937
        %939 = vrot.lane.b32.xlu0 %v694, 96
        %v940 = vpop.permute.xlu0 %939
        %941 = vrot.lane.b32.xlu0 %v696, 96
        %v942 = vpop.permute.xlu0 %941
        %943 = vrot.lane.b32.xlu0 %v701, 96
        %v944 = vpop.permute.xlu0 %943
        %945 = vrot.lane.b32.xlu0 %v703, 96
        %v946 = vpop.permute.xlu0 %945
        %947 = vrot.lane.b32.xlu0 %v707, 96
        %v948 = vpop.permute.xlu0 %947
        %949 = vrot.lane.b32.xlu0 %v709, 96
        %v950 = vpop.permute.xlu0 %949
        %951 = vrot.lane.b32.xlu0 %v713, 96
        %v952 = vpop.permute.xlu0 %951
        %953 = vrot.lane.b32.xlu0 %v715, 96
        %v954 = vpop.permute.xlu0 %953
        %v963 = vrot.slane %v948, 4
        %v964 = vsel %vm719, %v963, %v940
        %v965 = vrot.slane %v940, 4
        %v966 = vsel %vm719, %v948, %v965
        %v968 = vunpack.c.l.s4 1983009808
        %v969 = vunpack.c.0.s8 %v968
        %v970 = vperm.slane %v964, %v969
        %v972 = vunpack.c.l.s4 1983009808
        %v973 = vunpack.c.0.s8 %v972
        %v974 = vperm.slane %v966, %v973
        %v975 = vrot.slane %v952, 4
        %v976 = vsel %vm719, %v975, %v944
        %v977 = vrot.slane %v944, 4
        %v978 = vsel %vm719, %v952, %v977
        %v980 = vunpack.c.l.s4 1983009808
        %v981 = vunpack.c.0.s8 %v980
        %v982 = vperm.slane %v976, %v981
        %v984 = vunpack.c.l.s4 1983009808
        %v985 = vunpack.c.0.s8 %v984
        %v986 = vperm.slane %v978, %v985
        %v987 = vrot.slane %v982, 4
        %v988 = vsel %vm719, %v987, %v970
        %v989 = vrot.slane %v970, 4
        %v990 = vsel %vm719, %v982, %v989
        %v992 = vunpack.c.l.s4 1934713408
        %v993 = vunpack.c.0.s8 %v992
        %v994 = vperm.slane %v988, %v993
        %v996 = vunpack.c.l.s4 1934713408
        %v997 = vunpack.c.0.s8 %v996
        %v998 = vperm.slane %v990, %v997
        %v999 = vrot.slane %v986, 4
        %v1000 = vsel %vm719, %v999, %v974
        %v1001 = vrot.slane %v974, 4
        %v1002 = vsel %vm719, %v986, %v1001
        %v1004 = vunpack.c.l.s4 1934713408
        %v1005 = vunpack.c.0.s8 %v1004
        %v1006 = vperm.slane %v1000, %v1005
        %v1008 = vunpack.c.l.s4 1934713408
        %v1009 = vunpack.c.0.s8 %v1008
        %v1010 = vperm.slane %v1002, %v1009
        %v1011 = vrot.slane %v994, 4
        %v1012 = vsel %vm719, 0.0, %v1011
        %v1013 = vrot.slane %v998, 4
        %v1014 = vsel %vm719, 0.0, %v1013
        %v1015 = vrot.slane %v1006, 4
        %v1016 = vsel %vm719, 0.0, %v1015
        %v1017 = vrot.slane %v1010, 4
        %v1018 = vsel %vm719, 0.0, %v1017
        %v1019 = vrot.slane %v950, 4
        %v1020 = vsel %vm719, %v1019, %v942
        %v1021 = vrot.slane %v942, 4
        %v1022 = vsel %vm719, %v950, %v1021
        %v1024 = vunpack.c.l.s4 1983009808
        %v1025 = vunpack.c.0.s8 %v1024
        %v1026 = vperm.slane %v1020, %v1025
        %v1028 = vunpack.c.l.s4 1983009808
        %v1029 = vunpack.c.0.s8 %v1028
        %v1030 = vperm.slane %v1022, %v1029
        %v1031 = vrot.slane %v954, 4
        %v1032 = vsel %vm719, %v1031, %v946
        %v1033 = vrot.slane %v946, 4
        %v1034 = vsel %vm719, %v954, %v1033
        %v1036 = vunpack.c.l.s4 1983009808
        %v1037 = vunpack.c.0.s8 %v1036
        %v1038 = vperm.slane %v1032, %v1037
        %v1040 = vunpack.c.l.s4 1983009808
        %v1041 = vunpack.c.0.s8 %v1040
        %v1042 = vperm.slane %v1034, %v1041
        %v1043 = vrot.slane %v1038, 4
        %v1044 = vsel %vm719, %v1043, %v1026
        %v1045 = vrot.slane %v1026, 4
        %v1046 = vsel %vm719, %v1038, %v1045
        %v1048 = vunpack.c.l.s4 1934713408
        %v1049 = vunpack.c.0.s8 %v1048
        %v1050 = vperm.slane %v1044, %v1049
        %v1052 = vunpack.c.l.s4 1934713408
        %v1053 = vunpack.c.0.s8 %v1052
        %v1054 = vperm.slane %v1046, %v1053
        %v1055 = vrot.slane %v1042, 4
        %v1056 = vsel %vm719, %v1055, %v1030
        %v1057 = vrot.slane %v1030, 4
        %v1058 = vsel %vm719, %v1042, %v1057
        %v1060 = vunpack.c.l.s4 1934713408
        %v1061 = vunpack.c.0.s8 %v1060
        %v1062 = vperm.slane %v1056, %v1061
        %v1064 = vunpack.c.l.s4 1934713408
        %v1065 = vunpack.c.0.s8 %v1064
        %v1066 = vperm.slane %v1058, %v1065
        %v1067 = vrot.slane %v1050, 4
        %v1068 = vsel %vm719, 0.0, %v1067
        %v1069 = vrot.slane %v1054, 4
        %v1070 = vsel %vm719, 0.0, %v1069
        %v1071 = vrot.slane %v1062, 4
        %v1072 = vsel %vm719, 0.0, %v1071
        %v1073 = vrot.slane %v1066, 4
        %v1074 = vsel %vm719, 0.0, %v1073
        %v1075 = vsel %vm719, %v1013, %v994
        %v1077 = vunpack.c.l.s4 1983009808
        %v1078 = vunpack.c.0.s8 %v1077
        %v1079 = vperm.slane %v1075, %v1078
        %v1080 = vrot.slane %v1014, 4
        %v1081 = vsel %vm719, %v1080, %v1012
        %v1083 = vunpack.c.l.s4 1983009808
        %v1084 = vunpack.c.0.s8 %v1083
        %v1085 = vperm.slane %v1081, %v1084
        %v1086 = vsel %vm719, %v1017, %v1006
        %v1088 = vunpack.c.l.s4 1983009808
        %v1089 = vunpack.c.0.s8 %v1088
        %v1090 = vperm.slane %v1086, %v1089
        %v1091 = vrot.slane %v1018, 4
        %v1092 = vsel %vm719, %v1091, %v1016
        %v1094 = vunpack.c.l.s4 1983009808
        %v1095 = vunpack.c.0.s8 %v1094
        %v1096 = vperm.slane %v1092, %v1095
        %v1097 = vrot.slane %v1085, 4
        %v1098 = vsel %vm719, %v1097, %v1079
        %v1099 = vrot.slane %v1079, 4
        %v1100 = vsel %vm719, %v1085, %v1099
        %v1102 = vunpack.c.l.s4 1934713408
        %v1103 = vunpack.c.0.s8 %v1102
        %v1104 = vperm.slane %v1098, %v1103
        %v1106 = vunpack.c.l.s4 1934713408
        %v1107 = vunpack.c.0.s8 %v1106
        %v1108 = vperm.slane %v1100, %v1107
        %v1109 = vrot.slane %v1096, 4
        %v1110 = vsel %vm719, %v1109, %v1090
        %v1111 = vrot.slane %v1090, 4
        %v1112 = vsel %vm719, %v1096, %v1111
        %v1114 = vunpack.c.l.s4 1934713408
        %v1115 = vunpack.c.0.s8 %v1114
        %v1116 = vperm.slane %v1110, %v1115
        %v1118 = vunpack.c.l.s4 1934713408
        %v1119 = vunpack.c.0.s8 %v1118
        %v1120 = vperm.slane %v1112, %v1119
        %v1121 = vrot.slane %v1116, 4
        %v1122 = vsel %vm719, %v1121, %v1104
        %v1123 = vrot.slane %v1104, 4
        %v1124 = vsel %vm719, %v1116, %v1123
        %v1125 = vrot.slane %v1120, 4
        %v1126 = vsel %vm719, %v1125, %v1108
        %v1127 = vrot.slane %v1108, 4
        %v1128 = vsel %vm719, %v1120, %v1127
        %v1129 = vsel %vm719, %v1069, %v1050
        %v1131 = vunpack.c.l.s4 1983009808
        %v1132 = vunpack.c.0.s8 %v1131
        %v1133 = vperm.slane %v1129, %v1132
        %v1134 = vrot.slane %v1070, 4
        %v1135 = vsel %vm719, %v1134, %v1068
        %v1137 = vunpack.c.l.s4 1983009808
        %v1138 = vunpack.c.0.s8 %v1137
        %v1139 = vperm.slane %v1135, %v1138
        %v1140 = vsel %vm719, %v1073, %v1062
        %v1142 = vunpack.c.l.s4 1983009808
        %v1143 = vunpack.c.0.s8 %v1142
        %v1144 = vperm.slane %v1140, %v1143
        %v1145 = vrot.slane %v1074, 4
        %v1146 = vsel %vm719, %v1145, %v1072
        %v1148 = vunpack.c.l.s4 1983009808
        %v1149 = vunpack.c.0.s8 %v1148
        %v1150 = vperm.slane %v1146, %v1149
        %v1151 = vrot.slane %v1139, 4
        %v1152 = vsel %vm719, %v1151, %v1133
        %v1153 = vrot.slane %v1133, 4
        %v1154 = vsel %vm719, %v1139, %v1153
        %v1156 = vunpack.c.l.s4 1934713408
        %v1157 = vunpack.c.0.s8 %v1156
        %v1158 = vperm.slane %v1152, %v1157
        %v1160 = vunpack.c.l.s4 1934713408
        %v1161 = vunpack.c.0.s8 %v1160
        %v1162 = vperm.slane %v1154, %v1161
        %v1163 = vrot.slane %v1150, 4
        %v1164 = vsel %vm719, %v1163, %v1144
        %v1165 = vrot.slane %v1144, 4
        %v1166 = vsel %vm719, %v1150, %v1165
        %v1168 = vunpack.c.l.s4 1934713408
        %v1169 = vunpack.c.0.s8 %v1168
        %v1170 = vperm.slane %v1164, %v1169
        %v1172 = vunpack.c.l.s4 1934713408
        %v1173 = vunpack.c.0.s8 %v1172
        %v1174 = vperm.slane %v1166, %v1173
        %v1175 = vrot.slane %v1170, 4
        %v1176 = vsel %vm719, %v1175, %v1158
        %v1177 = vrot.slane %v1158, 4
        %v1178 = vsel %vm719, %v1170, %v1177
        %v1179 = vrot.slane %v1174, 4
        %v1180 = vsel %vm719, %v1179, %v1162
        %v1181 = vrot.slane %v1162, 4
        %v1182 = vsel %vm719, %v1174, %v1181
        %1183 = vrot.lane.b32.xlu0 %v694, 64
        %v1184 = vpop.permute.xlu0 %1183
        %1185 = vrot.lane.b32.xlu0 %v696, 64
        %v1186 = vpop.permute.xlu0 %1185
        %1187 = vrot.lane.b32.xlu0 %v701, 64
        %v1188 = vpop.permute.xlu0 %1187
        %1189 = vrot.lane.b32.xlu0 %v703, 64
        %v1190 = vpop.permute.xlu0 %1189
        %1191 = vrot.lane.b32.xlu0 %v707, 64
        %v1192 = vpop.permute.xlu0 %1191
        %1193 = vrot.lane.b32.xlu0 %v709, 64
        %v1194 = vpop.permute.xlu0 %1193
        %1195 = vrot.lane.b32.xlu0 %v713, 64
        %v1196 = vpop.permute.xlu0 %1195
        %1197 = vrot.lane.b32.xlu0 %v715, 64
        %v1198 = vpop.permute.xlu0 %1197
        %v1207 = vrot.slane %v1192, 4
        %v1208 = vsel %vm719, %v1207, %v1184
        %v1209 = vrot.slane %v1184, 4
        %v1210 = vsel %vm719, %v1192, %v1209
        %v1212 = vunpack.c.l.s4 1983009808
        %v1213 = vunpack.c.0.s8 %v1212
        %v1214 = vperm.slane %v1208, %v1213
        %v1216 = vunpack.c.l.s4 1983009808
        %v1217 = vunpack.c.0.s8 %v1216
        %v1218 = vperm.slane %v1210, %v1217
        %v1219 = vrot.slane %v1196, 4
        %v1220 = vsel %vm719, %v1219, %v1188
        %v1221 = vrot.slane %v1188, 4
        %v1222 = vsel %vm719, %v1196, %v1221
        %v1224 = vunpack.c.l.s4 1983009808
        %v1225 = vunpack.c.0.s8 %v1224
        %v1226 = vperm.slane %v1220, %v1225
        %v1228 = vunpack.c.l.s4 1983009808
        %v1229 = vunpack.c.0.s8 %v1228
        %v1230 = vperm.slane %v1222, %v1229
        %v1231 = vrot.slane %v1226, 4
        %v1232 = vsel %vm719, %v1231, %v1214
        %v1233 = vrot.slane %v1214, 4
        %v1234 = vsel %vm719, %v1226, %v1233
        %v1236 = vunpack.c.l.s4 1934713408
        %v1237 = vunpack.c.0.s8 %v1236
        %v1238 = vperm.slane %v1232, %v1237
        %v1240 = vunpack.c.l.s4 1934713408
        %v1241 = vunpack.c.0.s8 %v1240
        %v1242 = vperm.slane %v1234, %v1241
        %v1243 = vrot.slane %v1230, 4
        %v1244 = vsel %vm719, %v1243, %v1218
        %v1245 = vrot.slane %v1218, 4
        %v1246 = vsel %vm719, %v1230, %v1245
        %v1248 = vunpack.c.l.s4 1934713408
        %v1249 = vunpack.c.0.s8 %v1248
        %v1250 = vperm.slane %v1244, %v1249
        %v1252 = vunpack.c.l.s4 1934713408
        %v1253 = vunpack.c.0.s8 %v1252
        %v1254 = vperm.slane %v1246, %v1253
        %v1255 = vrot.slane %v1238, 4
        %v1256 = vsel %vm719, 0.0, %v1255
        %v1257 = vrot.slane %v1242, 4
        %v1258 = vsel %vm719, 0.0, %v1257
        %v1259 = vrot.slane %v1250, 4
        %v1260 = vsel %vm719, 0.0, %v1259
        %v1261 = vrot.slane %v1254, 4
        %v1262 = vsel %vm719, 0.0, %v1261
        %v1263 = vrot.slane %v1194, 4
        %v1264 = vsel %vm719, %v1263, %v1186
        %v1265 = vrot.slane %v1186, 4
        %v1266 = vsel %vm719, %v1194, %v1265
        %v1268 = vunpack.c.l.s4 1983009808
        %v1269 = vunpack.c.0.s8 %v1268
        %v1270 = vperm.slane %v1264, %v1269
        %v1272 = vunpack.c.l.s4 1983009808
        %v1273 = vunpack.c.0.s8 %v1272
        %v1274 = vperm.slane %v1266, %v1273
        %v1275 = vrot.slane %v1198, 4
        %v1276 = vsel %vm719, %v1275, %v1190
        %v1277 = vrot.slane %v1190, 4
        %v1278 = vsel %vm719, %v1198, %v1277
        %v1280 = vunpack.c.l.s4 1983009808
        %v1281 = vunpack.c.0.s8 %v1280
        %v1282 = vperm.slane %v1276, %v1281
        %v1284 = vunpack.c.l.s4 1983009808
        %v1285 = vunpack.c.0.s8 %v1284
        %v1286 = vperm.slane %v1278, %v1285
        %v1287 = vrot.slane %v1282, 4
        %v1288 = vsel %vm719, %v1287, %v1270
        %v1289 = vrot.slane %v1270, 4
        %v1290 = vsel %vm719, %v1282, %v1289
        %v1292 = vunpack.c.l.s4 1934713408
        %v1293 = vunpack.c.0.s8 %v1292
        %v1294 = vperm.slane %v1288, %v1293
        %v1296 = vunpack.c.l.s4 1934713408
        %v1297 = vunpack.c.0.s8 %v1296
        %v1298 = vperm.slane %v1290, %v1297
        %v1299 = vrot.slane %v1286, 4
        %v1300 = vsel %vm719, %v1299, %v1274
        %v1301 = vrot.slane %v1274, 4
        %v1302 = vsel %vm719, %v1286, %v1301
        %v1304 = vunpack.c.l.s4 1934713408
        %v1305 = vunpack.c.0.s8 %v1304
        %v1306 = vperm.slane %v1300, %v1305
        %v1308 = vunpack.c.l.s4 1934713408
        %v1309 = vunpack.c.0.s8 %v1308
        %v1310 = vperm.slane %v1302, %v1309
        %v1311 = vrot.slane %v1294, 4
        %v1312 = vsel %vm719, 0.0, %v1311
        %v1313 = vrot.slane %v1298, 4
        %v1314 = vsel %vm719, 0.0, %v1313
        %v1315 = vrot.slane %v1306, 4
        %v1316 = vsel %vm719, 0.0, %v1315
        %v1317 = vrot.slane %v1310, 4
        %v1318 = vsel %vm719, 0.0, %v1317
        %v1319 = vsel %vm719, %v1257, %v1238
        %v1321 = vunpack.c.l.s4 1983009808
        %v1322 = vunpack.c.0.s8 %v1321
        %v1323 = vperm.slane %v1319, %v1322
        %v1324 = vrot.slane %v1258, 4
        %v1325 = vsel %vm719, %v1324, %v1256
        %v1327 = vunpack.c.l.s4 1983009808
        %v1328 = vunpack.c.0.s8 %v1327
        %v1329 = vperm.slane %v1325, %v1328
        %v1330 = vsel %vm719, %v1261, %v1250
        %v1332 = vunpack.c.l.s4 1983009808
        %v1333 = vunpack.c.0.s8 %v1332
        %v1334 = vperm.slane %v1330, %v1333
        %v1335 = vrot.slane %v1262, 4
        %v1336 = vsel %vm719, %v1335, %v1260
        %v1338 = vunpack.c.l.s4 1983009808
        %v1339 = vunpack.c.0.s8 %v1338
        %v1340 = vperm.slane %v1336, %v1339
        %v1341 = vrot.slane %v1329, 4
        %v1342 = vsel %vm719, %v1341, %v1323
        %v1343 = vrot.slane %v1323, 4
        %v1344 = vsel %vm719, %v1329, %v1343
        %v1346 = vunpack.c.l.s4 1934713408
        %v1347 = vunpack.c.0.s8 %v1346
        %v1348 = vperm.slane %v1342, %v1347
        %v1350 = vunpack.c.l.s4 1934713408
        %v1351 = vunpack.c.0.s8 %v1350
        %v1352 = vperm.slane %v1344, %v1351
        %v1353 = vrot.slane %v1340, 4
        %v1354 = vsel %vm719, %v1353, %v1334
        %v1355 = vrot.slane %v1334, 4
        %v1356 = vsel %vm719, %v1340, %v1355
        %v1358 = vunpack.c.l.s4 1934713408
        %v1359 = vunpack.c.0.s8 %v1358
        %v1360 = vperm.slane %v1354, %v1359
        %v1362 = vunpack.c.l.s4 1934713408
        %v1363 = vunpack.c.0.s8 %v1362
        %v1364 = vperm.slane %v1356, %v1363
        %v1365 = vrot.slane %v1360, 4
        %v1366 = vsel %vm719, %v1365, %v1348
        %v1367 = vrot.slane %v1348, 4
        %v1368 = vsel %vm719, %v1360, %v1367
        %v1369 = vrot.slane %v1364, 4
        %v1370 = vsel %vm719, %v1369, %v1352
        %v1371 = vrot.slane %v1352, 4
        %v1372 = vsel %vm719, %v1364, %v1371
        %v1373 = vsel %vm719, %v1313, %v1294
        %v1375 = vunpack.c.l.s4 1983009808
        %v1376 = vunpack.c.0.s8 %v1375
        %v1377 = vperm.slane %v1373, %v1376
        %v1378 = vrot.slane %v1314, 4
        %v1379 = vsel %vm719, %v1378, %v1312
        %v1381 = vunpack.c.l.s4 1983009808
        %v1382 = vunpack.c.0.s8 %v1381
        %v1383 = vperm.slane %v1379, %v1382
        %v1384 = vsel %vm719, %v1317, %v1306
        %v1386 = vunpack.c.l.s4 1983009808
        %v1387 = vunpack.c.0.s8 %v1386
        %v1388 = vperm.slane %v1384, %v1387
        %v1389 = vrot.slane %v1318, 4
        %v1390 = vsel %vm719, %v1389, %v1316
        %v1392 = vunpack.c.l.s4 1983009808
        %v1393 = vunpack.c.0.s8 %v1392
        %v1394 = vperm.slane %v1390, %v1393
        %v1395 = vrot.slane %v1383, 4
        %v1396 = vsel %vm719, %v1395, %v1377
        %v1397 = vrot.slane %v1377, 4
        %v1398 = vsel %vm719, %v1383, %v1397
        %v1400 = vunpack.c.l.s4 1934713408
        %v1401 = vunpack.c.0.s8 %v1400
        %v1402 = vperm.slane %v1396, %v1401
        %v1404 = vunpack.c.l.s4 1934713408
        %v1405 = vunpack.c.0.s8 %v1404
        %v1406 = vperm.slane %v1398, %v1405
        %v1407 = vrot.slane %v1394, 4
        %v1408 = vsel %vm719, %v1407, %v1388
        %v1409 = vrot.slane %v1388, 4
        %v1410 = vsel %vm719, %v1394, %v1409
        %v1412 = vunpack.c.l.s4 1934713408
        %v1413 = vunpack.c.0.s8 %v1412
        %v1414 = vperm.slane %v1408, %v1413
        %v1416 = vunpack.c.l.s4 1934713408
        %v1417 = vunpack.c.0.s8 %v1416
        %v1418 = vperm.slane %v1410, %v1417
        %v1419 = vrot.slane %v1414, 4
        %v1420 = vsel %vm719, %v1419, %v1402
        %v1421 = vrot.slane %v1402, 4
        %v1422 = vsel %vm719, %v1414, %v1421
        %v1423 = vrot.slane %v1418, 4
        %v1424 = vsel %vm719, %v1423, %v1406
        %v1425 = vrot.slane %v1406, 4
        %v1426 = vsel %vm719, %v1418, %v1425
        %v1427 = vpack.c.bf16 %v1366, %v1366
        %v1428 = vpack.c.bf16 %v1368, %v1368
        %v1429 = vpack.c.bf16 %v1370, %v1370
        %v1430 = vpack.c.bf16 %v1372, %v1372
        %v1431 = vpack.c.bf16 %v1420, %v1420
        %v1432 = vpack.c.bf16 %v1422, %v1422
        %v1433 = vpack.c.bf16 %v1424, %v1424
        %v1434 = vpack.c.bf16 %v1426, %v1426
        %v1435 = vpack.c.bf16 %v878, %v878
        %v1436 = vpack.c.bf16 %v880, %v880
        %v1437 = vpack.c.bf16 %v882, %v882
        %v1438 = vpack.c.bf16 %v884, %v884
        %v1439 = vpack.c.bf16 %v932, %v932
        %v1440 = vpack.c.bf16 %v934, %v934
        %v1441 = vpack.c.bf16 %v936, %v936
        %v1442 = vpack.c.bf16 %v938, %v938
        %v1443 = vpack.c.bf16 %v1122, %v1122
        %v1444 = vpack.c.bf16 %v1124, %v1124
        %v1445 = vpack.c.bf16 %v1126, %v1126
        %v1446 = vpack.c.bf16 %v1128, %v1128
        %v1447 = vpack.c.bf16 %v1176, %v1176
        %v1448 = vpack.c.bf16 %v1178, %v1178
        %v1449 = vpack.c.bf16 %v1180, %v1180
        %v1450 = vpack.c.bf16 %v1182, %v1182
        %vm1451 = vcmask 64512
        %v1453 = vsel %vm1451, %v1435, 0
        %v1456 = vsel %vm1451, %v1443, 0
        %1458 = vmatpush.bf16.xpose.msra.mxu0 0
        %1459 = vmatpush.bf16.xpose.msra.mxu0 0
        %1460 = vmatpush.bf16.xpose.msra.mxu0 0
        %1461 = vmatpush.bf16.xpose.msra.mxu0 0
        %1462 = vmatpush.bf16.xpose.msra.mxu0 0
        %1463 = vmatpush.bf16.xpose.msra.mxu0 0
        %1464 = vmatpush.bf16.xpose.msra.mxu0 0
        %1465 = vmatpush.bf16.xpose.msra.mxu0 %v1456
        %1466 = vmatmul.bf16.gmra.mxu0 %v1453
        %v1467 = vpop.f32.mrf.mxu0
        %v1468 = vadd.f32 0.0, %v1467
        %v1469 = vpop.f32.mrf.mxu0
        %1470 = vdwg.mxu0
        %v1472 = vsel %vm1451, %v1436, 0
        %v1475 = vsel %vm1451, %v1444, 0
        %1477 = vmatpush.bf16.xpose.msra.mxu0 0
        %1478 = vmatpush.bf16.xpose.msra.mxu0 0
        %1479 = vmatpush.bf16.xpose.msra.mxu0 0
        %1480 = vmatpush.bf16.xpose.msra.mxu0 0
        %1481 = vmatpush.bf16.xpose.msra.mxu0 0
        %1482 = vmatpush.bf16.xpose.msra.mxu0 0
        %1483 = vmatpush.bf16.xpose.msra.mxu0 0
        %1484 = vmatpush.bf16.xpose.msra.mxu0 %v1475
        %1485 = vmatmul.bf16.gmra.mxu0 %v1472
        %v1486 = vpop.f32.mrf.mxu0
        %v1487 = vadd.f32 0.0, %v1486
        %v1488 = vpop.f32.mrf.mxu0
        %1489 = vdwg.mxu0
        %v1491 = vsel %vm1451, %v1437, 0
        %v1494 = vsel %vm1451, %v1445, 0
        %1496 = vmatpush.bf16.xpose.msra.mxu0 0
        %1497 = vmatpush.bf16.xpose.msra.mxu0 0
        %1498 = vmatpush.bf16.xpose.msra.mxu0 0
        %1499 = vmatpush.bf16.xpose.msra.mxu0 0
        %1500 = vmatpush.bf16.xpose.msra.mxu0 0
        %1501 = vmatpush.bf16.xpose.msra.mxu0 0
        %1502 = vmatpush.bf16.xpose.msra.mxu0 0
        %1503 = vmatpush.bf16.xpose.msra.mxu0 %v1494
        %1504 = vmatmul.bf16.gmra.mxu0 %v1491
        %v1505 = vpop.f32.mrf.mxu0
        %v1506 = vadd.f32 0.0, %v1505
        %v1507 = vpop.f32.mrf.mxu0
        %1508 = vdwg.mxu0
        %v1510 = vsel %vm1451, %v1438, 0
        %v1513 = vsel %vm1451, %v1446, 0
        %1515 = vmatpush.bf16.xpose.msra.mxu0 0
        %1516 = vmatpush.bf16.xpose.msra.mxu0 0
        %1517 = vmatpush.bf16.xpose.msra.mxu0 0
        %1518 = vmatpush.bf16.xpose.msra.mxu0 0
        %1519 = vmatpush.bf16.xpose.msra.mxu0 0
        %1520 = vmatpush.bf16.xpose.msra.mxu0 0
        %1521 = vmatpush.bf16.xpose.msra.mxu0 0
        %1522 = vmatpush.bf16.xpose.msra.mxu0 %v1513
        %1523 = vmatmul.bf16.gmra.mxu0 %v1510
        %v1524 = vpop.f32.mrf.mxu0
        %v1525 = vadd.f32 0.0, %v1524
        %v1526 = vpop.f32.mrf.mxu0
        %1527 = vdwg.mxu0
        %v1529 = vsel %vm1451, %v1439, 0
        %v1532 = vsel %vm1451, %v1447, 0
        %1534 = vmatpush.bf16.xpose.msra.mxu0 0
        %1535 = vmatpush.bf16.xpose.msra.mxu0 0
        %1536 = vmatpush.bf16.xpose.msra.mxu0 0
        %1537 = vmatpush.bf16.xpose.msra.mxu0 0
        %1538 = vmatpush.bf16.xpose.msra.mxu0 0
        %1539 = vmatpush.bf16.xpose.msra.mxu0 0
        %1540 = vmatpush.bf16.xpose.msra.mxu0 0
        %1541 = vmatpush.bf16.xpose.msra.mxu0 %v1532
        %1542 = vmatmul.bf16.gmra.mxu0 %v1529
        %v1543 = vpop.f32.mrf.mxu0
        %v1544 = vadd.f32 0.0, %v1543
        %v1545 = vpop.f32.mrf.mxu0
        %1546 = vdwg.mxu0
        %v1548 = vsel %vm1451, %v1440, 0
        %v1551 = vsel %vm1451, %v1448, 0
        %1553 = vmatpush.bf16.xpose.msra.mxu0 0
        %1554 = vmatpush.bf16.xpose.msra.mxu0 0
        %1555 = vmatpush.bf16.xpose.msra.mxu0 0
        %1556 = vmatpush.bf16.xpose.msra.mxu0 0
        %1557 = vmatpush.bf16.xpose.msra.mxu0 0
        %1558 = vmatpush.bf16.xpose.msra.mxu0 0
        %1559 = vmatpush.bf16.xpose.msra.mxu0 0
        %1560 = vmatpush.bf16.xpose.msra.mxu0 %v1551
        %1561 = vmatmul.bf16.gmra.mxu0 %v1548
        %v1562 = vpop.f32.mrf.mxu0
        %v1563 = vadd.f32 0.0, %v1562
        %v1564 = vpop.f32.mrf.mxu0
        %1565 = vdwg.mxu0
        %v1567 = vsel %vm1451, %v1441, 0
        %v1570 = vsel %vm1451, %v1449, 0
        %1572 = vmatpush.bf16.xpose.msra.mxu0 0
        %1573 = vmatpush.bf16.xpose.msra.mxu0 0
        %1574 = vmatpush.bf16.xpose.msra.mxu0 0
        %1575 = vmatpush.bf16.xpose.msra.mxu0 0
        %1576 = vmatpush.bf16.xpose.msra.mxu0 0
        %1577 = vmatpush.bf16.xpose.msra.mxu0 0
        %1578 = vmatpush.bf16.xpose.msra.mxu0 0
        %1579 = vmatpush.bf16.xpose.msra.mxu0 %v1570
        %1580 = vmatmul.bf16.gmra.mxu0 %v1567
        %v1581 = vpop.f32.mrf.mxu0
        %v1582 = vadd.f32 0.0, %v1581
        %v1583 = vpop.f32.mrf.mxu0
        %1584 = vdwg.mxu0
        %v1586 = vsel %vm1451, %v1442, 0
        %v1589 = vsel %vm1451, %v1450, 0
        %1591 = vmatpush.bf16.xpose.msra.mxu0 0
        %1592 = vmatpush.bf16.xpose.msra.mxu0 0
        %1593 = vmatpush.bf16.xpose.msra.mxu0 0
        %1594 = vmatpush.bf16.xpose.msra.mxu0 0
        %1595 = vmatpush.bf16.xpose.msra.mxu0 0
        %1596 = vmatpush.bf16.xpose.msra.mxu0 0
        %1597 = vmatpush.bf16.xpose.msra.mxu0 0
        %1598 = vmatpush.bf16.xpose.msra.mxu0 %v1589
        %1599 = vmatmul.bf16.gmra.mxu0 %v1586
        %v1600 = vpop.f32.mrf.mxu0
        %v1601 = vadd.f32 0.0, %v1600
        %v1602 = vpop.f32.mrf.mxu0
        %1603 = vdwg.mxu0
        %v1604 = vmul.f32 %v1468, 0.35355338
        %v1605 = vmul.f32 %v1487, 0.35355338
        %v1606 = vmul.f32 %v1506, 0.35355338
        %v1607 = vmul.f32 %v1525, 0.35355338
        %v1608 = vmul.f32 %v1544, 0.35355338
        %v1609 = vmul.f32 %v1563, 0.35355338
        %v1610 = vmul.f32 %v1582, 0.35355338
        %v1611 = vmul.f32 %v1601, 0.35355338
        %v1612 = vadd.f32 %v1604, %v595
        %v1613 = vadd.f32 %v1605, %v595
        %v1614 = vadd.f32 %v1606, %v595
        %v1615 = vadd.f32 %v1607, %v595
        %v1616 = vadd.f32 %v1608, %v596
        %v1617 = vadd.f32 %v1609, %v596
        %v1618 = vadd.f32 %v1610, %v596
        %v1619 = vadd.f32 %v1611, %v596
        %v1620 = vsel %vm1451, %v1612, -inf
        %1621 = vmax.xlane.f32.xlu0 %v1620
        %v1622 = vpop.xlane.xlu0 %1621
        %v1623 = vsel %vm1451, %v1613, -inf
        %1624 = vmax.xlane.f32.xlu0 %v1623
        %v1625 = vpop.xlane.xlu0 %1624
        %v1626 = vsel %vm1451, %v1614, -inf
        %1627 = vmax.xlane.f32.xlu0 %v1626
        %v1628 = vpop.xlane.xlu0 %1627
        %v1629 = vsel %vm1451, %v1615, -inf
        %1630 = vmax.xlane.f32.xlu0 %v1629
        %v1631 = vpop.xlane.xlu0 %1630
        %v1632 = vsel %vm1451, %v1616, -inf
        %1633 = vmax.xlane.f32.xlu0 %v1632
        %v1634 = vpop.xlane.xlu0 %1633
        %v1635 = vsel %vm1451, %v1617, -inf
        %1636 = vmax.xlane.f32.xlu0 %v1635
        %v1637 = vpop.xlane.xlu0 %1636
        %v1638 = vsel %vm1451, %v1618, -inf
        %1639 = vmax.xlane.f32.xlu0 %v1638
        %v1640 = vpop.xlane.xlu0 %1639
        %v1641 = vsel %vm1451, %v1619, -inf
        %1642 = vmax.xlane.f32.xlu0 %v1641
        %v1643 = vpop.xlane.xlu0 %1642
        %v1644 = vsub.f32 %v1612, %v1622
        %v1645 = vsub.f32 %v1613, %v1625
        %v1646 = vsub.f32 %v1614, %v1628
        %v1647 = vsub.f32 %v1615, %v1631
        %v1648 = vsub.f32 %v1616, %v1634
        %v1649 = vsub.f32 %v1617, %v1637
        %v1650 = vsub.f32 %v1618, %v1640
        %v1651 = vsub.f32 %v1619, %v1643
        %v1652 = vmul.f32 %v1644, 1.442695
        %v1653 = vpow.pop %v1652
        %v1654 = vmul.f32 %v1645, 1.442695
        %v1655 = vpow.pop %v1654
        %v1656 = vmul.f32 %v1646, 1.442695
        %v1657 = vpow.pop %v1656
        %v1658 = vmul.f32 %v1647, 1.442695
        %v1659 = vpow.pop %v1658
        %v1660 = vmul.f32 %v1648, 1.442695
        %v1661 = vpow.pop %v1660
        %v1662 = vmul.f32 %v1649, 1.442695
        %v1663 = vpow.pop %v1662
        %v1664 = vmul.f32 %v1650, 1.442695
        %v1665 = vpow.pop %v1664
        %v1666 = vmul.f32 %v1651, 1.442695
        %v1667 = vpow.pop %v1666
        %v1668 = vsel %vm1451, %v1653, 0.0
        %1669 = vadd.xlane.f32.xlu0 %v1668
        %v1670 = vpop.xlane.xlu0 %1669
        %v1671 = vsel %vm1451, %v1655, 0.0
        %1672 = vadd.xlane.f32.xlu0 %v1671
        %v1673 = vpop.xlane.xlu0 %1672
        %v1674 = vsel %vm1451, %v1657, 0.0
        %1675 = vadd.xlane.f32.xlu0 %v1674
        %v1676 = vpop.xlane.xlu0 %1675
        %v1677 = vsel %vm1451, %v1659, 0.0
        %1678 = vadd.xlane.f32.xlu0 %v1677
        %v1679 = vpop.xlane.xlu0 %1678
        %v1680 = vsel %vm1451, %v1661, 0.0
        %1681 = vadd.xlane.f32.xlu0 %v1680
        %v1682 = vpop.xlane.xlu0 %1681
        %v1683 = vsel %vm1451, %v1663, 0.0
        %1684 = vadd.xlane.f32.xlu0 %v1683
        %v1685 = vpop.xlane.xlu0 %1684
        %v1686 = vsel %vm1451, %v1665, 0.0
        %1687 = vadd.xlane.f32.xlu0 %v1686
        %v1688 = vpop.xlane.xlu0 %1687
        %v1689 = vsel %vm1451, %v1667, 0.0
        %1690 = vadd.xlane.f32.xlu0 %v1689
        %v1691 = vpop.xlane.xlu0 %1690
        %v1692 = vrcp.pop %v1670
        %v1693 = vrcp.pop %v1673
        %v1694 = vrcp.pop %v1676
        %v1695 = vrcp.pop %v1679
        %v1696 = vrcp.pop %v1682
        %v1697 = vrcp.pop %v1685
        %v1698 = vrcp.pop %v1688
        %v1699 = vrcp.pop %v1691
        %v1700 = vmul.f32 %v1653, %v1692
        %v1701 = vmul.f32 %v1655, %v1693
        %v1702 = vmul.f32 %v1657, %v1694
        %v1703 = vmul.f32 %v1659, %v1695
        %v1704 = vmul.f32 %v1661, %v1696
        %v1705 = vmul.f32 %v1663, %v1697
        %v1706 = vmul.f32 %v1665, %v1698
        %v1707 = vmul.f32 %v1667, %v1699
        %v1708 = vpack.c.bf16 %v1700, %v1700
        %v1709 = vpack.c.bf16 %v1701, %v1701
        %v1710 = vpack.c.bf16 %v1702, %v1702
        %v1711 = vpack.c.bf16 %v1703, %v1703
        %v1712 = vpack.c.bf16 %v1704, %v1704
        %v1713 = vpack.c.bf16 %v1705, %v1705
        %v1714 = vpack.c.bf16 %v1706, %v1706
        %v1715 = vpack.c.bf16 %v1707, %v1707
        %v1717 = vsel %vm1451, %v1708, 0
        %vm1719 = vcmask 1043456
        %v1721 = vsel %vm1719, %v1427, 0
        %1723 = vmatpush.bf16.msra.mxu0 0
        %1724 = vmatpush.bf16.msra.mxu0 0
        %1725 = vmatpush.bf16.msra.mxu0 0
        %1726 = vmatpush.bf16.msra.mxu0 0
        %1727 = vmatpush.bf16.msra.mxu0 0
        %1728 = vmatpush.bf16.msra.mxu0 0
        %1729 = vmatpush.bf16.msra.mxu0 0
        %1730 = vmatpush.bf16.msra.mxu0 %v1721
        %1731 = vmatmul.bf16.gmra.mxu0 %v1717
        %v1732 = vpop.f32.mrf.mxu0
        %v1733 = vadd.f32 0.0, %v1732
        %v1734 = vpop.f32.mrf.mxu0
        %1735 = vdwg.mxu0
        %v1737 = vsel %vm1451, %v1709, 0
        %v1740 = vsel %vm1719, %v1428, 0
        %1742 = vmatpush.bf16.msra.mxu0 0
        %1743 = vmatpush.bf16.msra.mxu0 0
        %1744 = vmatpush.bf16.msra.mxu0 0
        %1745 = vmatpush.bf16.msra.mxu0 0
        %1746 = vmatpush.bf16.msra.mxu0 0
        %1747 = vmatpush.bf16.msra.mxu0 0
        %1748 = vmatpush.bf16.msra.mxu0 0
        %1749 = vmatpush.bf16.msra.mxu0 %v1740
        %1750 = vmatmul.bf16.gmra.mxu0 %v1737
        %v1751 = vpop.f32.mrf.mxu0
        %v1752 = vadd.f32 0.0, %v1751
        %v1753 = vpop.f32.mrf.mxu0
        %1754 = vdwg.mxu0
        %v1756 = vsel %vm1451, %v1710, 0
        %v1759 = vsel %vm1719, %v1429, 0
        %1761 = vmatpush.bf16.msra.mxu0 0
        %1762 = vmatpush.bf16.msra.mxu0 0
        %1763 = vmatpush.bf16.msra.mxu0 0
        %1764 = vmatpush.bf16.msra.mxu0 0
        %1765 = vmatpush.bf16.msra.mxu0 0
        %1766 = vmatpush.bf16.msra.mxu0 0
        %1767 = vmatpush.bf16.msra.mxu0 0
        %1768 = vmatpush.bf16.msra.mxu0 %v1759
        %1769 = vmatmul.bf16.gmra.mxu0 %v1756
        %v1770 = vpop.f32.mrf.mxu0
        %v1771 = vadd.f32 0.0, %v1770
        %v1772 = vpop.f32.mrf.mxu0
        %1773 = vdwg.mxu0
        %v1775 = vsel %vm1451, %v1711, 0
        %v1778 = vsel %vm1719, %v1430, 0
        %1780 = vmatpush.bf16.msra.mxu0 0
        %1781 = vmatpush.bf16.msra.mxu0 0
        %1782 = vmatpush.bf16.msra.mxu0 0
        %1783 = vmatpush.bf16.msra.mxu0 0
        %1784 = vmatpush.bf16.msra.mxu0 0
        %1785 = vmatpush.bf16.msra.mxu0 0
        %1786 = vmatpush.bf16.msra.mxu0 0
        %1787 = vmatpush.bf16.msra.mxu0 %v1778
        %1788 = vmatmul.bf16.gmra.mxu0 %v1775
        %v1789 = vpop.f32.mrf.mxu0
        %v1790 = vadd.f32 0.0, %v1789
        %v1791 = vpop.f32.mrf.mxu0
        %1792 = vdwg.mxu0
        %v1794 = vsel %vm1451, %v1712, 0
        %v1797 = vsel %vm1719, %v1431, 0
        %1799 = vmatpush.bf16.msra.mxu0 0
        %1800 = vmatpush.bf16.msra.mxu0 0
        %1801 = vmatpush.bf16.msra.mxu0 0
        %1802 = vmatpush.bf16.msra.mxu0 0
        %1803 = vmatpush.bf16.msra.mxu0 0
        %1804 = vmatpush.bf16.msra.mxu0 0
        %1805 = vmatpush.bf16.msra.mxu0 0
        %1806 = vmatpush.bf16.msra.mxu0 %v1797
        %1807 = vmatmul.bf16.gmra.mxu0 %v1794
        %v1808 = vpop.f32.mrf.mxu0
        %v1809 = vadd.f32 0.0, %v1808
        %v1810 = vpop.f32.mrf.mxu0
        %1811 = vdwg.mxu0
        %v1813 = vsel %vm1451, %v1713, 0
        %v1816 = vsel %vm1719, %v1432, 0
        %1818 = vmatpush.bf16.msra.mxu0 0
        %1819 = vmatpush.bf16.msra.mxu0 0
        %1820 = vmatpush.bf16.msra.mxu0 0
        %1821 = vmatpush.bf16.msra.mxu0 0
        %1822 = vmatpush.bf16.msra.mxu0 0
        %1823 = vmatpush.bf16.msra.mxu0 0
        %1824 = vmatpush.bf16.msra.mxu0 0
        %1825 = vmatpush.bf16.msra.mxu0 %v1816
        %1826 = vmatmul.bf16.gmra.mxu0 %v1813
        %v1827 = vpop.f32.mrf.mxu0
        %v1828 = vadd.f32 0.0, %v1827
        %v1829 = vpop.f32.mrf.mxu0
        %1830 = vdwg.mxu0
        %v1832 = vsel %vm1451, %v1714, 0
        %v1835 = vsel %vm1719, %v1433, 0
        %1837 = vmatpush.bf16.msra.mxu0 0
        %1838 = vmatpush.bf16.msra.mxu0 0
        %1839 = vmatpush.bf16.msra.mxu0 0
        %1840 = vmatpush.bf16.msra.mxu0 0
        %1841 = vmatpush.bf16.msra.mxu0 0
        %1842 = vmatpush.bf16.msra.mxu0 0
        %1843 = vmatpush.bf16.msra.mxu0 0
        %1844 = vmatpush.bf16.msra.mxu0 %v1835
        %1845 = vmatmul.bf16.gmra.mxu0 %v1832
        %v1846 = vpop.f32.mrf.mxu0
        %v1847 = vadd.f32 0.0, %v1846
        %v1848 = vpop.f32.mrf.mxu0
        %1849 = vdwg.mxu0
        %v1851 = vsel %vm1451, %v1715, 0
        %v1854 = vsel %vm1719, %v1434, 0
        %1856 = vmatpush.bf16.msra.mxu0 0
        %1857 = vmatpush.bf16.msra.mxu0 0
        %1858 = vmatpush.bf16.msra.mxu0 0
        %1859 = vmatpush.bf16.msra.mxu0 0
        %1860 = vmatpush.bf16.msra.mxu0 0
        %1861 = vmatpush.bf16.msra.mxu0 0
        %1862 = vmatpush.bf16.msra.mxu0 0
        %1863 = vmatpush.bf16.msra.mxu0 %v1854
        %1864 = vmatmul.bf16.gmra.mxu0 %v1851
        %v1865 = vpop.f32.mrf.mxu0
        %v1866 = vadd.f32 0.0, %v1865
        %v1867 = vpop.f32.mrf.mxu0
        %1868 = vdwg.mxu0
        %v1869 = vrot.slane %v1771, 4
        %v1870 = vsel %vm719, %v1869, %v1733
        %v1871 = vrot.slane %v1733, 4
        %v1872 = vsel %vm719, %v1771, %v1871
        %v1874 = vunpack.c.l.s4 1983009808
        %v1875 = vunpack.c.0.s8 %v1874
        %v1876 = vperm.slane %v1870, %v1875
        %v1878 = vunpack.c.l.s4 1983009808
        %v1879 = vunpack.c.0.s8 %v1878
        %v1880 = vperm.slane %v1872, %v1879
        %v1881 = vrot.slane %v1790, 4
        %v1882 = vsel %vm719, %v1881, %v1752
        %v1883 = vrot.slane %v1752, 4
        %v1884 = vsel %vm719, %v1790, %v1883
        %v1886 = vunpack.c.l.s4 1983009808
        %v1887 = vunpack.c.0.s8 %v1886
        %v1888 = vperm.slane %v1882, %v1887
        %v1890 = vunpack.c.l.s4 1983009808
        %v1891 = vunpack.c.0.s8 %v1890
        %v1892 = vperm.slane %v1884, %v1891
        %v1893 = vrot.slane %v1888, 4
        %v1894 = vsel %vm719, %v1893, %v1876
        %v1895 = vrot.slane %v1876, 4
        %v1896 = vsel %vm719, %v1888, %v1895
        %v1898 = vunpack.c.l.s4 1934713408
        %v1899 = vunpack.c.0.s8 %v1898
        %v1900 = vperm.slane %v1894, %v1899
        %v1902 = vunpack.c.l.s4 1934713408
        %v1903 = vunpack.c.0.s8 %v1902
        %v1904 = vperm.slane %v1896, %v1903
        %v1905 = vrot.slane %v1892, 4
        %v1906 = vsel %vm719, %v1905, %v1880
        %v1907 = vrot.slane %v1880, 4
        %v1908 = vsel %vm719, %v1892, %v1907
        %v1910 = vunpack.c.l.s4 1934713408
        %v1911 = vunpack.c.0.s8 %v1910
        %v1912 = vperm.slane %v1906, %v1911
        %v1914 = vunpack.c.l.s4 1934713408
        %v1915 = vunpack.c.0.s8 %v1914
        %v1916 = vperm.slane %v1908, %v1915
        %v1917 = vrot.slane %v1900, 4
        %v1918 = vsel %vm719, 0.0, %v1917
        %v1919 = vrot.slane %v1904, 4
        %v1920 = vsel %vm719, 0.0, %v1919
        %v1921 = vrot.slane %v1912, 4
        %v1922 = vsel %vm719, 0.0, %v1921
        %v1923 = vrot.slane %v1916, 4
        %v1924 = vsel %vm719, 0.0, %v1923
        %v1925 = vrot.slane %v1847, 4
        %v1926 = vsel %vm719, %v1925, %v1809
        %v1927 = vrot.slane %v1809, 4
        %v1928 = vsel %vm719, %v1847, %v1927
        %v1930 = vunpack.c.l.s4 1983009808
        %v1931 = vunpack.c.0.s8 %v1930
        %v1932 = vperm.slane %v1926, %v1931
        %v1934 = vunpack.c.l.s4 1983009808
        %v1935 = vunpack.c.0.s8 %v1934
        %v1936 = vperm.slane %v1928, %v1935
        %v1937 = vrot.slane %v1866, 4
        %v1938 = vsel %vm719, %v1937, %v1828
        %v1939 = vrot.slane %v1828, 4
        %v1940 = vsel %vm719, %v1866, %v1939
        %v1942 = vunpack.c.l.s4 1983009808
        %v1943 = vunpack.c.0.s8 %v1942
        %v1944 = vperm.slane %v1938, %v1943
        %v1946 = vunpack.c.l.s4 1983009808
        %v1947 = vunpack.c.0.s8 %v1946
        %v1948 = vperm.slane %v1940, %v1947
        %v1949 = vrot.slane %v1944, 4
        %v1950 = vsel %vm719, %v1949, %v1932
        %v1951 = vrot.slane %v1932, 4
        %v1952 = vsel %vm719, %v1944, %v1951
        %v1954 = vunpack.c.l.s4 1934713408
        %v1955 = vunpack.c.0.s8 %v1954
        %v1956 = vperm.slane %v1950, %v1955
        %v1958 = vunpack.c.l.s4 1934713408
        %v1959 = vunpack.c.0.s8 %v1958
        %v1960 = vperm.slane %v1952, %v1959
        %v1961 = vrot.slane %v1948, 4
        %v1962 = vsel %vm719, %v1961, %v1936
        %v1963 = vrot.slane %v1936, 4
        %v1964 = vsel %vm719, %v1948, %v1963
        %v1966 = vunpack.c.l.s4 1934713408
        %v1967 = vunpack.c.0.s8 %v1966
        %v1968 = vperm.slane %v1962, %v1967
        %v1970 = vunpack.c.l.s4 1934713408
        %v1971 = vunpack.c.0.s8 %v1970
        %v1972 = vperm.slane %v1964, %v1971
        %v1973 = vrot.slane %v1956, 4
        %v1974 = vsel %vm719, 0.0, %v1973
        %v1975 = vrot.slane %v1960, 4
        %v1976 = vsel %vm719, 0.0, %v1975
        %v1977 = vrot.slane %v1968, 4
        %v1978 = vsel %vm719, 0.0, %v1977
        %v1979 = vrot.slane %v1972, 4
        %v1980 = vsel %vm719, 0.0, %v1979
        %v1981 = vsel %vm719, %v1919, %v1900
        %v1983 = vunpack.c.l.s4 1983009808
        %v1984 = vunpack.c.0.s8 %v1983
        %v1985 = vperm.slane %v1981, %v1984
        %v1986 = vrot.slane %v1920, 4
        %v1987 = vsel %vm719, %v1986, %v1918
        %v1989 = vunpack.c.l.s4 1983009808
        %v1990 = vunpack.c.0.s8 %v1989
        %v1991 = vperm.slane %v1987, %v1990
        %v1992 = vsel %vm719, %v1923, %v1912
        %v1994 = vunpack.c.l.s4 1983009808
        %v1995 = vunpack.c.0.s8 %v1994
        %v1996 = vperm.slane %v1992, %v1995
        %v1997 = vrot.slane %v1924, 4
        %v1998 = vsel %vm719, %v1997, %v1922
        %v2000 = vunpack.c.l.s4 1983009808
        %v2001 = vunpack.c.0.s8 %v2000
        %v2002 = vperm.slane %v1998, %v2001
        %v2003 = vrot.slane %v1991, 4
        %v2004 = vsel %vm719, %v2003, %v1985
        %v2005 = vrot.slane %v1985, 4
        %v2006 = vsel %vm719, %v1991, %v2005
        %v2008 = vunpack.c.l.s4 1934713408
        %v2009 = vunpack.c.0.s8 %v2008
        %v2010 = vperm.slane %v2004, %v2009
        %v2012 = vunpack.c.l.s4 1934713408
        %v2013 = vunpack.c.0.s8 %v2012
        %v2014 = vperm.slane %v2006, %v2013
        %v2015 = vrot.slane %v2002, 4
        %v2016 = vsel %vm719, %v2015, %v1996
        %v2017 = vrot.slane %v1996, 4
        %v2018 = vsel %vm719, %v2002, %v2017
        %v2020 = vunpack.c.l.s4 1934713408
        %v2021 = vunpack.c.0.s8 %v2020
        %v2022 = vperm.slane %v2016, %v2021
        %v2024 = vunpack.c.l.s4 1934713408
        %v2025 = vunpack.c.0.s8 %v2024
        %v2026 = vperm.slane %v2018, %v2025
        %v2027 = vrot.slane %v2022, 4
        %v2028 = vsel %vm719, %v2027, %v2010
        %v2029 = vrot.slane %v2010, 4
        %v2030 = vsel %vm719, %v2022, %v2029
        %v2031 = vrot.slane %v2026, 4
        %v2032 = vsel %vm719, %v2031, %v2014
        %v2033 = vrot.slane %v2014, 4
        %v2034 = vsel %vm719, %v2026, %v2033
        %v2035 = vsel %vm719, %v1975, %v1956
        %v2037 = vunpack.c.l.s4 1983009808
        %v2038 = vunpack.c.0.s8 %v2037
        %v2039 = vperm.slane %v2035, %v2038
        %v2040 = vrot.slane %v1976, 4
        %v2041 = vsel %vm719, %v2040, %v1974
        %v2043 = vunpack.c.l.s4 1983009808
        %v2044 = vunpack.c.0.s8 %v2043
        %v2045 = vperm.slane %v2041, %v2044
        %v2046 = vsel %vm719, %v1979, %v1968
        %v2048 = vunpack.c.l.s4 1983009808
        %v2049 = vunpack.c.0.s8 %v2048
        %v2050 = vperm.slane %v2046, %v2049
        %v2051 = vrot.slane %v1980, 4
        %v2052 = vsel %vm719, %v2051, %v1978
        %v2054 = vunpack.c.l.s4 1983009808
        %v2055 = vunpack.c.0.s8 %v2054
        %v2056 = vperm.slane %v2052, %v2055
        %v2057 = vrot.slane %v2045, 4
        %v2058 = vsel %vm719, %v2057, %v2039
        %v2059 = vrot.slane %v2039, 4
        %v2060 = vsel %vm719, %v2045, %v2059
        %v2062 = vunpack.c.l.s4 1934713408
        %v2063 = vunpack.c.0.s8 %v2062
        %v2064 = vperm.slane %v2058, %v2063
        %v2066 = vunpack.c.l.s4 1934713408
        %v2067 = vunpack.c.0.s8 %v2066
        %v2068 = vperm.slane %v2060, %v2067
        %v2069 = vrot.slane %v2056, 4
        %v2070 = vsel %vm719, %v2069, %v2050
        %v2071 = vrot.slane %v2050, 4
        %v2072 = vsel %vm719, %v2056, %v2071
        %v2074 = vunpack.c.l.s4 1934713408
        %v2075 = vunpack.c.0.s8 %v2074
        %v2076 = vperm.slane %v2070, %v2075
        %v2078 = vunpack.c.l.s4 1934713408
        %v2079 = vunpack.c.0.s8 %v2078
        %v2080 = vperm.slane %v2072, %v2079
        %v2081 = vrot.slane %v2076, 4
        %v2082 = vsel %vm719, %v2081, %v2064
        %v2083 = vrot.slane %v2064, 4
        %v2084 = vsel %vm719, %v2076, %v2083
        %v2085 = vrot.slane %v2080, 4
        %v2086 = vsel %vm719, %v2085, %v2068
        %v2087 = vrot.slane %v2068, 4
        %v2088 = vsel %vm719, %v2080, %v2087
        %2091 = vrot.lane.b32.xlu0 %v2030, 8
        %v2092 = vpop.permute.xlu0 %2091
        %2093 = vrot.lane.b32.xlu0 %v2084, 8
        %v2094 = vpop.permute.xlu0 %2093
        %2099 = vrot.lane.b32.xlu0 %v2032, 16
        %v2100 = vpop.permute.xlu0 %2099
        %2101 = vrot.lane.b32.xlu0 %v2086, 16
        %v2102 = vpop.permute.xlu0 %2101
        %2107 = vrot.lane.b32.xlu0 %v2034, 24
        %v2108 = vpop.permute.xlu0 %2107
        %2109 = vrot.lane.b32.xlu0 %v2088, 24
        %v2110 = vpop.permute.xlu0 %2109
        %v2113 = vsel %vm1451, %v2028, %v2092
        %v2114 = vsel %vm1451, %v2082, %v2094
        %vm2115 = vcmask 130048
        %v2116 = vsel %vm2115, %v2113, %v2100
        %v2117 = vsel %vm2115, %v2114, %v2102
        %vm2118 = vcmask 195584
        %v2119 = vsel %vm2118, %v2116, %v2108
        %v2120 = vsel %vm2118, %v2117, %v2110
        %v2121 = vpack.c.bf16 %v2120, %v2119
        %v2122 = vld [vmem:[%s544] sm:$0xf]
        %v2123 = vld [vmem:[%s544 + $0x4] sm:$0xf]
        %v2124 = vld [vmem:[%s544 + $0x8] sm:$0xf]
        %v2125 = vld [vmem:[%s544 + $0xc] sm:$0xf]
        %v2126 = vperm.slane %v567, 4
        %v2131 = vunpack.c.l.b16 %v2122
        %v2132 = vunpack.c.l.b16 %v2123
        %v2133 = vunpack.c.l.b16 %v2124
        %v2134 = vunpack.c.l.b16 %v2125
        %v2135 = vpack.c.b16 %v2132, %v2131
        %v2136 = vpack.c.b16 %v2134, %v2133
        %v2140 = vsel %vm605, %v2121, 0
        %2142 = vmatpush.bf16.msra.mxu0 0
        %2143 = vmatpush.bf16.msra.mxu0 0
        %2144 = vmatpush.bf16.msra.mxu0 0
        %2145 = vmatpush.bf16.msra.mxu0 0
        %2146 = vmatpush.bf16.msra.mxu0 0
        %2147 = vmatpush.bf16.msra.mxu0 0
        %2148 = vmatpush.bf16.msra.mxu0 %v2136
        %2149 = vmatpush.bf16.msra.mxu0 %v2135
        %2150 = vmatmul.bf16.gmra.mxu0 %v2140
        %v2151 = vpop.f32.mrf.mxu0
        %v2152 = vadd.f32 %v2126, %v2151
        %v2153 = vpop.f32.mrf.mxu0
        %v2154 = vadd.f32 %v2126, %v2153
        %2155 = vdwg.mxu0
        %v2156 = vadd.f32 %v2152, %v661
        %v2157 = vadd.f32 %v2154, %v662
        %v2158 = vsel %vm605, %v2156, 0.0
        %2159 = vadd.xlane.f32.xlu0 %v2158
        %v2160 = vpop.xlane.xlu0 %2159
        %v2161 = vsel %vm605, %v2157, 0.0
        %2162 = vadd.xlane.f32.xlu0 %v2161
        %v2163 = vpop.xlane.xlu0 %2162
        %v2164 = vmul.f32 %v2160, %v618
        %v2165 = vmul.f32 %v2163, %v618
        %v2166 = vsub.f32 %v2156, %v2164
        %v2167 = vsub.f32 %v2157, %v2165
        %v2168 = vmul.f32 %v2166, %v2166
        %v2169 = vmul.f32 %v2167, %v2167
        %v2170 = vsel %vm605, %v2168, 0.0
        %2171 = vadd.xlane.f32.xlu0 %v2170
        %v2172 = vpop.xlane.xlu0 %2171
        %v2173 = vsel %vm605, %v2169, 0.0
        %2174 = vadd.xlane.f32.xlu0 %v2173
        %v2175 = vpop.xlane.xlu0 %2174
        %v2176 = vmul.f32 %v2172, %v618
        %v2177 = vmul.f32 %v2175, %v618
        %v2178 = vadd.f32 %v2176, 1e-05
        %v2179 = vadd.f32 %v2177, 1e-05
        %v2180 = vrsqrt.pop %v2178
        %v2181 = vmul.f32 %v2180, %v2178
        %v2182 = vmul.f32 %v2181, %v2180
        %v2183 = vmul.f32 0.5, %v2182
        %v2184 = vsub.f32 1.5, %v2183
        %v2185 = vmul.f32 %v2180, %v2184
        %vm2186 = vweird.f32 %v2178
        %vm2187 = vweird.f32 %v2180
        %vm2188 = vmor %vm2186, %vm2187
        %v2189 = vsel %vm2188, %v2180, %v2185
        %v2190 = vrsqrt.pop %v2179
        %v2191 = vmul.f32 %v2190, %v2179
        %v2192 = vmul.f32 %v2191, %v2190
        %v2193 = vmul.f32 0.5, %v2192
        %v2194 = vsub.f32 1.5, %v2193
        %v2195 = vmul.f32 %v2190, %v2194
        %vm2196 = vweird.f32 %v2179
        %vm2197 = vweird.f32 %v2190
        %vm2198 = vmor %vm2196, %vm2197
        %v2199 = vsel %vm2198, %v2190, %v2195
        %v2200 = vmul.f32 %v2166, %v2189
        %v2201 = vmul.f32 %v2167, %v2199
        %v2202 = vperm.slane %v567, 2
        %v2203 = vmul.f32 %v2200, %v2202
        %v2204 = vmul.f32 %v2201, %v2202
        %v2205 = vperm.slane %v567, 3
        %v2206 = vadd.f32 %v2203, %v2205
        %v2207 = vadd.f32 %v2204, %v2205
        %v2208 = vpack.c.bf16 %v2207, %v2206
        %v2209 = vld [vmem:[%s549] sm:$0xf]
        %v2210 = vld [vmem:[%s549 + $0x4] sm:$0xf]
        %v2211 = vld [vmem:[%s549 + $0x8] sm:$0xf]
        %v2212 = vld [vmem:[%s549 + $0xc] sm:$0xf]
        %v2213 = vperm.slane %v567, 7
        %v2218 = vunpack.c.l.b16 %v2209
        %v2219 = vunpack.c.l.b16 %v2210
        %v2220 = vunpack.c.l.b16 %v2211
        %v2221 = vunpack.c.l.b16 %v2212
        %v2222 = vpack.c.b16 %v2219, %v2218
        %v2223 = vpack.c.b16 %v2221, %v2220
        %v2227 = vsel %vm605, %v2208, 0
        %2229 = vmatpush.bf16.msra.mxu0 0
        %2230 = vmatpush.bf16.msra.mxu0 0
        %2231 = vmatpush.bf16.msra.mxu0 0
        %2232 = vmatpush.bf16.msra.mxu0 0
        %2233 = vmatpush.bf16.msra.mxu0 0
        %2234 = vmatpush.bf16.msra.mxu0 0
        %2235 = vmatpush.bf16.msra.mxu0 %v2223
        %2236 = vmatpush.bf16.msra.mxu0 %v2222
        %2237 = vmatmul.bf16.gmra.mxu0 %v2227
        %v2238 = vpop.f32.mrf.mxu0
        %v2239 = vadd.f32 %v2213, %v2238
        %v2240 = vpop.f32.mrf.mxu0
        %v2241 = vadd.f32 %v2213, %v2240
        %2242 = vdwg.mxu0
        %v2243 = vmax.f32 %v2239, 0.0
        %v2244 = vmax.f32 %v2241, 0.0
        %v2245 = vpack.c.bf16 %v2244, %v2243
        %v2246 = vld [vmem:[%s554] sm:$0xf]
        %v2247 = vld [vmem:[%s554 + $0x4] sm:$0xf]
        %v2248 = vld [vmem:[%s554 + $0x8] sm:$0xf]
        %v2249 = vld [vmem:[%s554 + $0xc] sm:$0xf]
        %v2250 = vld [vmem:[%s554 + $0x10] sm:$0xf]
        %v2251 = vld [vmem:[%s554 + $0x14] sm:$0xf]
        %v2252 = vld [vmem:[%s554 + $0x18] sm:$0xf]
        %v2253 = vld [vmem:[%s554 + $0x1c] sm:$0xf]
        %v2254 = vld [vmem:[%s554 + $0x20] sm:$0xf]
        %v2255 = vld [vmem:[%s554 + $0x24] sm:$0xf]
        %v2256 = vld [vmem:[%s554 + $0x28] sm:$0xf]
        %v2257 = vld [vmem:[%s554 + $0x2c] sm:$0xf]
        %v2258 = vld [vmem:[%s554 + $0x30] sm:$0xf]
        %v2259 = vld [vmem:[%s554 + $0x34] sm:$0xf]
        %v2260 = vld [vmem:[%s554 + $0x38] sm:$0xf]
        %v2261 = vld [vmem:[%s554 + $0x3c] sm:$0xf]
        %v2262 = vperm.slane %v567, 5
        %v2279 = vunpack.c.l.b16 %v2246
        %v2280 = vunpack.c.l.b16 %v2247
        %v2281 = vunpack.c.l.b16 %v2248
        %v2282 = vunpack.c.l.b16 %v2249
        %v2283 = vunpack.c.l.b16 %v2250
        %v2284 = vunpack.c.l.b16 %v2251
        %v2285 = vunpack.c.l.b16 %v2252
        %v2286 = vunpack.c.l.b16 %v2253
        %v2287 = vunpack.c.l.b16 %v2254
        %v2288 = vunpack.c.l.b16 %v2255
        %v2289 = vunpack.c.l.b16 %v2256
        %v2290 = vunpack.c.l.b16 %v2257
        %v2291 = vunpack.c.l.b16 %v2258
        %v2292 = vunpack.c.l.b16 %v2259
        %v2293 = vunpack.c.l.b16 %v2260
        %v2294 = vunpack.c.l.b16 %v2261
        %v2295 = vpack.c.b16 %v2280, %v2279
        %v2296 = vpack.c.b16 %v2282, %v2281
        %v2297 = vpack.c.b16 %v2284, %v2283
        %v2298 = vpack.c.b16 %v2286, %v2285
        %v2299 = vpack.c.b16 %v2288, %v2287
        %v2300 = vpack.c.b16 %v2290, %v2289
        %v2301 = vpack.c.b16 %v2292, %v2291
        %v2302 = vpack.c.b16 %v2294, %v2293
        %2311 = vmatpush.bf16.msra.mxu0 %v2302
        %2312 = vmatpush.bf16.msra.mxu0 %v2301
        %2313 = vmatpush.bf16.msra.mxu0 %v2300
        %2314 = vmatpush.bf16.msra.mxu0 %v2299
        %2315 = vmatpush.bf16.msra.mxu0 %v2298
        %2316 = vmatpush.bf16.msra.mxu0 %v2297
        %2317 = vmatpush.bf16.msra.mxu0 %v2296
        %2318 = vmatpush.bf16.msra.mxu0 %v2295
        %2319 = vmatmul.bf16.gmra.mxu0 %v2245
        %v2320 = vpop.f32.mrf.mxu0
        %v2321 = vadd.f32 %v2262, %v2320
        %v2322 = vpop.f32.mrf.mxu0
        %v2323 = vadd.f32 %v2262, %v2322
        %2324 = vdwg.mxu0
        %v2325 = vperm.slane %v568, 0
        %v2326 = vlaneseq
        %v2327 = vshrl.u32 %v2326, 7
        %2329 = vset.pattern.permute.xlu0 %v2327
        %2330 = vperm.xlu0 %2329, %v2325
        %v2331 = vpop.permute.xlu0 %2330
        %v2332 = vperm.slane %v568, 1
        %v2333 = vlaneseq
        %v2334 = vshrl.u32 %v2333, 7
        %2336 = vset.pattern.permute.xlu0 %v2334
        %2337 = vperm.xlu0 %2336, %v2332
        %v2338 = vpop.permute.xlu0 %2337
        %vm2339 = vcmp.gt.f32.partialorder %v2331, 0.5
        %vm2340 = vcmp.gt.f32.partialorder %v2338, 0.5
        %v2341 = vsel %vm2339, 1, 0
        %v2342 = vsel %vm2340, 1, 0
        %vm2343 = vcmp.eq.s32.totalorder %v2341, 1
        %vm2344 = vcmp.eq.s32.totalorder %v2342, 1
        %v2345 = vsel %vm2343, 0.0, %v2321
        %v2346 = vsel %vm2344, 0.0, %v2323
        %v2347 = vadd.f32 %v2345, %v2206
        %v2348 = vadd.f32 %v2346, %v2207
        %2349 = vst.msk [vmem:[#allocation2] sm:$0xff] %vm605, %v2347
        %2350 = vst.msk [vmem:[#allocation2 + $0x8] sm:$0xff] %vm605, %v2348
        %p2351 = scmp.eq.s32.totalorder %s29, 1
        // Predicated region
        $region73: #{tpu_custom_call.1} parent=67 // pred_check
          %p2352 = pneg %p2351
        $region74: #{tpu_custom_call.1} parent=67 // pred_check_branch
          %2354 = sbr.rel (%p2352) target = $region76
        $region75: #{tpu_custom_call.1} parent=67 // pred_region
          %v2355 = vld [vmem:[%s9] sm:$0x3]
          %v2356 = vld [vmem:[#allocation2] sm:$0xff]
          %v2357 = vld [vmem:[#allocation2 + $0x8] sm:$0xff]
          %v2358 = vsel %vm605, %v2356, 0.0
          %2359 = vadd.xlane.f32.xlu0 %v2358
          %v2360 = vpop.xlane.xlu0 %2359
          %v2361 = vsel %vm605, %v2357, 0.0
          %2362 = vadd.xlane.f32.xlu0 %v2361
          %v2363 = vpop.xlane.xlu0 %2362
          %v2364 = vmul.f32 %v2360, %v618
          %v2365 = vmul.f32 %v2363, %v618
          %v2366 = vsub.f32 %v2356, %v2364
          %v2367 = vsub.f32 %v2357, %v2365
          %v2368 = vmul.f32 %v2366, %v2366
          %v2369 = vmul.f32 %v2367, %v2367
          %v2370 = vsel %vm605, %v2368, 0.0
          %2371 = vadd.xlane.f32.xlu0 %v2370
          %v2372 = vpop.xlane.xlu0 %2371
          %v2373 = vsel %vm605, %v2369, 0.0
          %2374 = vadd.xlane.f32.xlu0 %v2373
          %v2375 = vpop.xlane.xlu0 %2374
          %v2376 = vmul.f32 %v2372, %v618
          %v2377 = vmul.f32 %v2375, %v618
          %v2378 = vadd.f32 %v2376, 1e-05
          %v2379 = vadd.f32 %v2377, 1e-05
          %v2380 = vrsqrt.pop %v2378
          %v2381 = vmul.f32 %v2380, %v2378
          %v2382 = vmul.f32 %v2381, %v2380
          %v2383 = vmul.f32 0.5, %v2382
          %v2384 = vsub.f32 1.5, %v2383
          %v2385 = vmul.f32 %v2380, %v2384
          %vm2386 = vweird.f32 %v2378
          %vm2387 = vweird.f32 %v2380
          %vm2388 = vmor %vm2386, %vm2387
          %v2389 = vsel %vm2388, %v2380, %v2385
          %v2390 = vrsqrt.pop %v2379
          %v2391 = vmul.f32 %v2390, %v2379
          %v2392 = vmul.f32 %v2391, %v2390
          %v2393 = vmul.f32 0.5, %v2392
          %v2394 = vsub.f32 1.5, %v2393
          %v2395 = vmul.f32 %v2390, %v2394
          %vm2396 = vweird.f32 %v2379
          %vm2397 = vweird.f32 %v2390
          %vm2398 = vmor %vm2396, %vm2397
          %v2399 = vsel %vm2398, %v2390, %v2395
          %v2400 = vmul.f32 %v2366, %v2389
          %v2401 = vmul.f32 %v2367, %v2399
          %v2402 = vperm.slane %v2355, 0
          %v2403 = vmul.f32 %v2400, %v2402
          %v2404 = vmul.f32 %v2401, %v2402
          %v2405 = vperm.slane %v2355, 1
          %v2406 = vadd.f32 %v2403, %v2405
          %v2407 = vadd.f32 %v2404, %v2405
          %v2408 = vsel %vm605, %v2406, 0.0
          %v2409 = vrot.slane %v2408, 4
          %v2410 = vadd.f32 %v2408, %v2409
          %v2411 = vrot.slane %v2410, 2
          %v2412 = vadd.f32 %v2410, %v2411
          %v2413 = vrot.slane %v2412, 1
          %v2414 = vadd.f32 %v2412, %v2413
          %v2415 = vsel %vm605, %v2407, 0.0
          %v2416 = vrot.slane %v2415, 4
          %v2417 = vadd.f32 %v2415, %v2416
          %v2418 = vrot.slane %v2417, 2
          %v2419 = vadd.f32 %v2417, %v2418
          %v2420 = vrot.slane %v2419, 1
          %v2421 = vadd.f32 %v2419, %v2420
          %v2422 = vmul.f32 %v2414, 0.125
          %v2423 = vmul.f32 %v2421, 0.125
          %v2424 = vpack.c.bf16 %v2422, %v2422
          %v2425 = vpack.c.bf16 %v2423, %v2423
          %v2426 = vld [vmem:[%s10] sm:$0xf]
          %v2427 = vld [vmem:[%s10 + $0x4] sm:$0xf]
          %v2428 = vld [vmem:[%s10 + $0x8] sm:$0xf]
          %v2429 = vld [vmem:[%s10 + $0xc] sm:$0xf]
          %v2430 = vld [vmem:[%s11] sm:$0x1]
          %v2432 = vperm.slane %v2430, 0
          %v2436 = vunpack.c.l.b16 %v2424
          %v2437 = vunpack.c.l.b16 %v2425
          %vm2438 = vcmask 1041409
          %v2439 = vsel %vm2438, %v2437, %v2436
          %v2440 = vpack.c.b16 %v2439, %v2439
          %v2445 = vunpack.c.l.b16 %v2426
          %v2446 = vunpack.c.l.b16 %v2427
          %v2447 = vunpack.c.l.b16 %v2428
          %v2448 = vunpack.c.l.b16 %v2429
          %v2449 = vpack.c.b16 %v2446, %v2445
          %v2450 = vpack.c.b16 %v2448, %v2447
          %v2454 = vsel %vm605, %v2440, 0
          %2456 = vmatpush.bf16.msra.mxu0 0
          %2457 = vmatpush.bf16.msra.mxu0 0
          %2458 = vmatpush.bf16.msra.mxu0 0
          %2459 = vmatpush.bf16.msra.mxu0 0
          %2460 = vmatpush.bf16.msra.mxu0 0
          %2461 = vmatpush.bf16.msra.mxu0 0
          %2462 = vmatpush.bf16.msra.mxu0 %v2450
          %2463 = vmatpush.bf16.msra.mxu0 %v2449
          %2464 = vmatmul.bf16.gmra.mxu0 %v2454
          %v2465 = vpop.f32.mrf.mxu0
          %v2466 = vadd.f32 %v2432, %v2465
          %v2467 = vpop.f32.mrf.mxu0
          %2468 = vdwg.mxu0
          %vm2469 = vcmask 58368
          %2470 = vst.msk [vmem:[#allocation3] sm:$0x3] %vm2469, %v2466
        $region76: #{tpu_custom_call.1} parent=67 // pred_fallthru
          _
        // Predicated region
        $region77: #{tpu_custom_call.1} parent=67 // pred_check
          %p2471 = pneg %p346
        $region78: #{tpu_custom_call.1} parent=67 // pred_check_branch
          %2473 = sbr.rel (%p2471) target = $region80
        $region79: #{tpu_custom_call.1} parent=67 // pred_region
          %2475 = vsyncadd [#allocation4], 0
          %s2476 = smul.addr %s28, 2
          %s2477 = scalar_lea.hbm %s12, %s2476
          %s2479 = sshll.u32 [#allocation3], 4
          %s2480 = int_to_ptr.vmem [resolvable:$true] %s2479
          %s2481 = sshll.u32 %s2477, 4
          %s2482 = int_to_ptr.hbm [resolvable:$true] %s2481
          %2484 = dma.vmem_to_hbm [thread:$0]  %s2480, 32, %s2482, [#allocation4]
        $region80: #{tpu_custom_call.1} parent=67 // pred_fallthru
          _
        // Predicated region
        $region81: #{tpu_custom_call.1} parent=67 // pred_check
          %p2485 = pneg %p346
        $region82: #{tpu_custom_call.1} parent=67 // pred_check_branch
          %2487 = sbr.rel (%p2485) target = $region84
        $region83: #{tpu_custom_call.1} parent=67 // pred_region
          %2489 = dma.done [#allocation4], 32
        $region84: #{tpu_custom_call.1} parent=67 // pred_fallthru
          _
      $region68: #{tpu_custom_call.1} parent=5 // pred_fallthru
        _
      %p2490 = scmp.le.s32.totalorder 2, %s19
      // Predicated region
      $region85: #{tpu_custom_call.1} parent=5 // pred_check
        %p2491 = pneg %p2490
      $region86: #{tpu_custom_call.1} parent=5 // pred_check_branch
        %2493 = sbr.rel (%p2491) target = $region88
      $region87: #{tpu_custom_call.1} parent=5 // pred_region
        %s2494 = ssub.s32 %s19, 2
      $region88: #{tpu_custom_call.1} parent=5 // pred_fallthru
        _
    $region6: #{tpu_custom_call.1} parent=1 // loop_footer
      %s23 = sadd.s32 1, %s19
    $region7: #{tpu_custom_call.1} parent=1 // loop_footer_branch
      %18 = sbr.rel target = $region3
    $region8: #{tpu_custom_call.1} parent=1 // loop_exit
      _
    %2495 = vsyncpa [#allocation4], 1
    %s2496 = scalar_lea.sflag [#allocation4], 1
    %2497 = vsyncpa %s2496, 1

</llo_original>
